<compile_context>
chip_gen: v6e
topology: v6e:2x2x1
jax: 0.10.0
libtpu: 0.0.40
codegen_flags: <defaults>
</compile_context>

<pallas_src>
import functools

import jax
import jax.numpy as jnp
from jax.experimental import pallas as pl
from jax.experimental.pallas import tpu as pltpu


# ----------------------------------------------------------------------------
# Kernel: whole rollout in one invocation, recurrence via unrolled fori_loop.
# ----------------------------------------------------------------------------
def _rnn_rollout_kernel(s_ref, h0_ref,
                        w1s_ref, w1h_ref, b1_ref,
                        w3_ref, b3_ref,
                        probs_ref, hid_ref,
                        pre_ref, *, action_space, a_pad, seq_len):
    """Fused T-step recurrent rollout.

    s_ref:    (T_pad, S_pad)    all states, VMEM resident
    h0_ref:   (1, Hs_pad)       initial hidden state
    w1s_ref:  (S_pad, HL_pad)   fc1 rows acting on the state
    w1h_ref:  (Hs_pad, HL_pad)  fc1 rows acting on the hidden state
    b1_ref:   (1, HL_pad)
    w3_ref:   (HL_pad, A_pad+Hs_pad)  fused fc3 (action logits | new hidden)
    b3_ref:   (1, A_pad+Hs_pad)
    probs_ref:(T_pad, A_pad)    softmax over the first `action_space` lanes
    hid_ref:  (T_pad, Hs_pad)   per-step new hidden states
    pre_ref:  (T_pad, HL_pad)   scratch: hoisted fc1 state contribution + b1
    """
    # Hoisted: fc1 state contribution for every step in one batched MXU pass.
    pre_ref[...] = (jnp.dot(s_ref[...], w1s_ref[...],
                            preferred_element_type=jnp.float32)
                    + b1_ref[...])

    # Weights / bias loaded once and reused across all unrolled steps.
    w1h = w1h_ref[...]
    w3 = w3_ref[...]
    b3 = b3_ref[...]

    # Lane mask for the masked softmax (hoisted out of the loop).
    lane = jax.lax.broadcasted_iota(jnp.int32, (1, a_pad), 1)
    is_action = lane < action_space

    # Zero the padded output slabs once so padding rows are well defined.
    probs_ref[...] = jnp.zeros_like(probs_ref)
    hid_ref[...] = jnp.zeros_like(hid_ref)

    def step(t, h_prev):
        # fc1 on the split input (== fc1(cat([state, hidden]))) + double tanh,
        # exactly as in the PyTorch forward.
        pre = pre_ref[pl.ds(t, 1), :] + jnp.dot(
            h_prev, w1h, preferred_element_type=jnp.float32)
        hid = jnp.tanh(jnp.tanh(pre))

        # Fused fc3: one N=256 matmul, then split into logits / new hidden.
        out = jnp.dot(hid, w3, preferred_element_type=jnp.float32) + b3
        logits = out[:, :a_pad]
        new_h = out[:, a_pad:]

        # Masked softmax over the first `action_space` lanes, exact divide.
        masked = jnp.where(is_action, logits, -jnp.inf)
        m = jnp.max(masked, axis=-1, keepdims=True)
        e = jnp.exp(masked - m)
        probs = e / jnp.sum(e, axis=-1, keepdims=True)

        probs_ref[pl.ds(t, 1), :] = probs
        hid_ref[pl.ds(t, 1), :] = new_h
        return new_h

    # Hidden state carried as a register value, fully unrolled serial chain.
    jax.lax.fori_loop(0, seq_len, step, h0_ref[...], unroll=True)


# ----------------------------------------------------------------------------
# Parameters (padded + fused once, raw weights kept for the reference)
# ----------------------------------------------------------------------------
def _round_up(n, m=128):
    return ((n + m - 1) // m) * m


def _pad2d(x, rows, cols):
    return jnp.zeros((rows, cols), x.dtype).at[:x.shape[0], :x.shape[1]].set(x)


def init_params(key, action_space, state_space, hidden_layer=16, hidden_state=16):
    """Deterministic synthetic parameters, weights stored as (in, out)."""
    k1, k2, k3, k4 = jax.random.split(key, 4)
    d_in = state_space + hidden_state
    d_out = action_space + hidden_state
    w1 = jax.random.normal(k1, (d_in, hidden_layer), jnp.float32) * 0.1
    b1 = jax.random.normal(k2, (hidden_layer,), jnp.float32) * 0.1
    w3 = jax.random.normal(k3, (hidden_layer, d_out), jnp.float32) * 0.1
    b3 = jax.random.normal(k4, (d_out,), jnp.float32) * 0.1
    # fc2 exists in the PyTorch __init__ but is unused in forward -> omitted.

    s_pad = _round_up(state_space)
    hs_pad = _round_up(hidden_state)
    hl_pad = _round_up(hidden_layer)
    a_pad = _round_up(action_space)

    # Fused fc3 weight/bias: columns [action logits | padding | new hidden | padding].
    w3_p = jnp.zeros((hl_pad, a_pad + hs_pad), jnp.float32)
    w3_p = w3_p.at[:hidden_layer, :action_space].set(w3[:, :action_space])
    w3_p = w3_p.at[:hidden_layer, a_pad:a_pad + hidden_state].set(w3[:, action_space:])
    b3_p = jnp.zeros((1, a_pad + hs_pad), jnp.float32)
    b3_p = b3_p.at[0, :action_space].set(b3[:action_space])
    b3_p = b3_p.at[0, a_pad:a_pad + hidden_state].set(b3[action_space:])

    return {
        "action_space": action_space,
        "state_space": state_space,
        "hidden_layer": hidden_layer,
        "hidden_state_dim": hidden_state,
        "pads": (s_pad, hs_pad, hl_pad, a_pad),
        # Raw (unpadded) weights for the pure-JAX reference.
        "w1": w1, "b1": b1, "w3": w3, "b3": b3,
        # Padded / fused weights used by the kernel (VMEM-resident per rollout).
        "w1s_p": _pad2d(w1[:state_space], s_pad, hl_pad),
        "w1h_p": _pad2d(w1[state_space:], hs_pad, hl_pad),
        "b1_p": _pad2d(b1[None, :], 1, hl_pad),
        "w3_p": w3_p,
        "b3_p": b3_p,
    }


# ----------------------------------------------------------------------------
# Wrappers
# ----------------------------------------------------------------------------
def rnn_policy_rollout(states, params, hidden0=None):
    """Run T recurrent steps in one pallas_call (no grid).

    states:  (T, state_space) float32
    hidden0: (hidden_state,) or None (zeros, like getInitHiddenState)
    returns: probs (T, action_space), hiddens (T, hidden_state)
    """
    a = params["action_space"]
    hs = params["hidden_state_dim"]
    state_space = params["state_space"]
    s_pad, hs_pad, hl_pad, a_pad = params["pads"]
    T = states.shape[0]
    T_pad = _round_up(T, 8)  # f32 sublane multiple -> dense (8,128) tiles

    if hidden0 is None:
        hidden0 = jnp.zeros((hs,), jnp.float32)

    # One-time padding per rollout (not per step).
    states_p = jnp.zeros((T_pad, s_pad), jnp.float32).at[:T, :state_space].set(states)
    h0_p = jnp.zeros((1, hs_pad), jnp.float32).at[0, :hs].set(hidden0)

    n_out = a_pad + hs_pad
    flops = (2 * T_pad * s_pad * hl_pad
             + 2 * T * (hs_pad * hl_pad + hl_pad * n_out))
    transcendentals = T * (2 * hl_pad + a_pad)
    bytes_accessed = 4 * (T_pad * (s_pad + a_pad + hs_pad) + hs_pad
                          + s_pad * hl_pad + hs_pad * hl_pad + hl_pad
                          + hl_pad * n_out + n_out)

    vmem_spec = pl.BlockSpec(memory_space=pltpu.MemorySpace.VMEM)

    probs_p, hid_p = pl.pallas_call(
        functools.partial(_rnn_rollout_kernel,
                          action_space=a, a_pad=a_pad, seq_len=T),
        out_shape=(
            jax.ShapeDtypeStruct((T_pad, a_pad), jnp.float32),
            jax.ShapeDtypeStruct((T_pad, hs_pad), jnp.float32),
        ),
        in_specs=[vmem_spec] * 7,
        out_specs=(vmem_spec, vmem_spec),
        scratch_shapes=[pltpu.VMEM((T_pad, hl_pad), jnp.float32)],
        cost_estimate=pl.CostEstimate(flops=int(flops),
                                      transcendentals=int(transcendentals),
                                      bytes_accessed=int(bytes_accessed)),
    )(states_p, h0_p,
      params["w1s_p"], params["w1h_p"], params["b1_p"],
      params["w3_p"], params["b3_p"])

    # Single slice per rollout (not per step).
    return probs_p[:T, :a], hid_p[:T, :hs]


def rnn_policy_forward(state, params, hidden_state=None):
    """Module-style single-step API: probs (actionSpace,), new hidden (hiddenState,)."""
    # TODO(synk): for tight env-interaction loops, keep the padded weights
    # VMEM-resident across calls (cross-pallas_call prefetch) instead of
    # re-staging them every single-step call.
    probs, hiddens = rnn_policy_rollout(state[None, :], params, hidden_state)
    return probs[0], hiddens[0]


# ----------------------------------------------------------------------------
# Pure-JAX reference (mirrors the PyTorch forward, stepped in Python)
# ----------------------------------------------------------------------------
def _reference_rollout(states, params, hidden0=None):
    a = params["action_space"]
    h = hidden0 if hidden0 is not None else jnp.zeros(
        (params["hidden_state_dim"],), jnp.float32)
    probs_list, hid_list = [], []
    for t in range(states.shape[0]):
        z = jnp.concatenate([states[t], h], axis=-1)
        hl = jnp.tanh(jnp.tanh(z @ params["w1"] + params["b1"]))
        o = hl @ params["w3"] + params["b3"]
        probs_list.append(jax.nn.softmax(o[:a], axis=-1))
        h = o[a:]
        hid_list.append(h)
    return jnp.stack(probs_list), jnp.stack(hid_list)


# ----------------------------------------------------------------------------
# Demo / validation
# ----------------------------------------------------------------------------
if __name__ == "__main__":
    ACTION_SPACE = 4
    STATE_SPACE = 16
    HIDDEN_LAYER = 32
    HIDDEN_STATE = 16
    T = 8  # rollout length fused into one pallas_call

    key = jax.random.PRNGKey(0)
    k_params, k_states, k_hidden = jax.random.split(key, 3)

    params = init_params(k_params, ACTION_SPACE, STATE_SPACE,
                         hidden_layer=HIDDEN_LAYER, hidden_state=HIDDEN_STATE)
    states = jax.random.normal(k_states, (T, STATE_SPACE), jnp.float32)
    hidden0 = jax.random.normal(k_hidden, (HIDDEN_STATE,), jnp.float32)

    # Fused rollout with the default (zero) hidden state, as the module does.
    probs_seq1, hid_seq1 = rnn_policy_rollout(states, params, hidden0=None)
    # Fused rollout starting from a non-trivial hidden state.
    probs_seq2, hid_seq2 = rnn_policy_rollout(states, params, hidden0=hidden0)
    # Module-style single-step call.
    probs_one, hid_one = rnn_policy_forward(states[0], params, hidden_state=hidden0)
    jax.block_until_ready((probs_seq1, hid_seq1, probs_seq2, hid_seq2,
                           probs_one, hid_one))

    # Validate against the plain-JAX reference.
    ref_p1, ref_h1 = _reference_rollout(states, params, hidden0=None)
    ref_p2, ref_h2 = _reference_rollout(states, params, hidden0=hidden0)

    assert jnp.allclose(hid_seq1, ref_h1, atol=1e-5), "hidden rollout (zero h0) mismatch"
    assert jnp.allclose(hid_seq2, ref_h2, atol=1e-5), "hidden rollout (given h0) mismatch"
    assert jnp.allclose(hid_one, ref_h2[0], atol=1e-5), "single-step hidden mismatch"
    # Exact softmax divide now -> tight tolerance.
    assert jnp.allclose(probs_seq1, ref_p1, atol=1e-5), "probs rollout (zero h0) mismatch"
    assert jnp.allclose(probs_seq2, ref_p2, atol=1e-5), "probs rollout (given h0) mismatch"
    assert jnp.allclose(probs_one, ref_p2[0], atol=1e-5), "single-step probs mismatch"
    assert jnp.allclose(jnp.sum(probs_seq1, axis=-1),
                        jnp.ones((T,), jnp.float32), atol=1e-5), "probs do not sum to 1"

    print("KERNEL_OK")
</pallas_src>

<mosaic_0001>
module attributes {stable_mosaic.version = 11 : i64} {
  func.func @_rnn_rollout_kernel(%arg0: memref<8x128xf32, #tpu.memory_space<vmem>>, %arg1: memref<1x128xf32, #tpu.memory_space<vmem>>, %arg2: memref<128x128xf32, #tpu.memory_space<vmem>>, %arg3: memref<128x128xf32, #tpu.memory_space<vmem>>, %arg4: memref<1x128xf32, #tpu.memory_space<vmem>>, %arg5: memref<128x256xf32, #tpu.memory_space<vmem>>, %arg6: memref<1x256xf32, #tpu.memory_space<vmem>>, %arg7: memref<8x128xf32, #tpu.memory_space<vmem>>, %arg8: memref<8x128xf32, #tpu.memory_space<vmem>>, %arg9: memref<8x128xf32, #tpu.memory_space<vmem>>) attributes {dimension_semantics = [], scalar_prefetch = 0 : i64, scratch_operands = 1 : i64, tpu.core_type = #tpu.core_type<tc>} {
    %c0 = arith.constant 0 : index
    %c0_0 = arith.constant 0 : index
    %0 = vector.load %arg0[%c0, %c0_0] : memref<8x128xf32, #tpu.memory_space<vmem>>, vector<8x128xf32>
    %c0_1 = arith.constant 0 : index
    %c0_2 = arith.constant 0 : index
    %1 = vector.load %arg2[%c0_1, %c0_2] : memref<128x128xf32, #tpu.memory_space<vmem>>, vector<128x128xf32>
    %cst = arith.constant dense<0.000000e+00> : vector<8x128xf32>
    %2 = tpu.matmul %0, %1, %cst {dimension_numbers = #tpu.dot_dimension_numbers<[1], [0], [0], [1], [0, 0, 1, 1], [], []>} : vector<8x128xf32>, vector<128x128xf32>, vector<8x128xf32> -> vector<8x128xf32>
    %c0_3 = arith.constant 0 : index
    %c0_4 = arith.constant 0 : index
    %3 = vector.load %arg4[%c0_3, %c0_4] : memref<1x128xf32, #tpu.memory_space<vmem>>, vector<1x128xf32>
    %4 = vector.broadcast %3 : vector<1x128xf32> to vector<8x128xf32>
    %5 = arith.addf %2, %4 : vector<8x128xf32>
    %c0_5 = arith.constant 0 : index
    %c0_6 = arith.constant 0 : index
    %6 = vector.load %arg9[%c0_5, %c0_6] : memref<8x128xf32, #tpu.memory_space<vmem>>, vector<8x128xf32>
    tpu.vector_store %arg9[%c0_5, %c0_6], %5 {strides = array<i32>} : memref<8x128xf32, #tpu.memory_space<vmem>>, vector<8x128xf32>,
    %c0_7 = arith.constant 0 : index
    %c0_8 = arith.constant 0 : index
    %7 = vector.load %arg3[%c0_7, %c0_8] : memref<128x128xf32, #tpu.memory_space<vmem>>, vector<128x128xf32>
    %c0_9 = arith.constant 0 : index
    %c0_10 = arith.constant 0 : index
    %8 = vector.load %arg5[%c0_9, %c0_10] : memref<128x256xf32, #tpu.memory_space<vmem>>, vector<128x256xf32>
    %c0_11 = arith.constant 0 : index
    %c0_12 = arith.constant 0 : index
    %9 = vector.load %arg6[%c0_11, %c0_12] : memref<1x256xf32, #tpu.memory_space<vmem>>, vector<1x256xf32>
    %10 = tpu.iota {dimensions = array<i32: 1>} : vector<1x128xi32>
    %c4_i32 = arith.constant 4 : i32
    %11 = vector.broadcast %c4_i32 : i32 to vector<1x128xi32>
    %12 = arith.cmpi slt, %10, %11 : vector<1x128xi32>
    %cst_13 = arith.constant 0.000000e+00 : f32
    %13 = vector.broadcast %cst_13 : f32 to vector<8x128xf32>
    %c0_14 = arith.constant 0 : index
    %c0_15 = arith.constant 0 : index
    %14 = vector.load %arg7[%c0_14, %c0_15] : memref<8x128xf32, #tpu.memory_space<vmem>>, vector<8x128xf32>
    tpu.vector_store %arg7[%c0_14, %c0_15], %13 {strides = array<i32>} : memref<8x128xf32, #tpu.memory_space<vmem>>, vector<8x128xf32>,
    %cst_16 = arith.constant 0.000000e+00 : f32
    %15 = vector.broadcast %cst_16 : f32 to vector<8x128xf32>
    %c0_17 = arith.constant 0 : index
    %c0_18 = arith.constant 0 : index
    %16 = vector.load %arg8[%c0_17, %c0_18] : memref<8x128xf32, #tpu.memory_space<vmem>>, vector<8x128xf32>
    tpu.vector_store %arg8[%c0_17, %c0_18], %15 {strides = array<i32>} : memref<8x128xf32, #tpu.memory_space<vmem>>, vector<8x128xf32>,
    %c0_19 = arith.constant 0 : index
    %c0_20 = arith.constant 0 : index
    %17 = vector.load %arg1[%c0_19, %c0_20] : memref<1x128xf32, #tpu.memory_space<vmem>>, vector<1x128xf32>
    %c0_i32 = arith.constant 0 : i32
    %18 = arith.index_cast %c0_i32 : i32 to index
    %c0_21 = arith.constant 0 : index
    %19 = vector.load %arg9[%18, %c0_21] : memref<8x128xf32, #tpu.memory_space<vmem>>, vector<1x128xf32>
    %cst_22 = arith.constant dense<0.000000e+00> : vector<1x128xf32>
    %20 = tpu.matmul %17, %7, %cst_22 {dimension_numbers = #tpu.dot_dimension_numbers<[1], [0], [0], [1], [0, 0, 1, 1], [], []>} : vector<1x128xf32>, vector<128x128xf32>, vector<1x128xf32> -> vector<1x128xf32>
    %21 = arith.addf %19, %20 : vector<1x128xf32>
    %22 = math.tanh %21 : vector<1x128xf32>
    %23 = math.tanh %22 : vector<1x128xf32>
    %cst_23 = arith.constant dense<0.000000e+00> : vector<1x256xf32>
    %24 = tpu.matmul %23, %8, %cst_23 {dimension_numbers = #tpu.dot_dimension_numbers<[1], [0], [0], [1], [0, 0, 1, 1], [], []>} : vector<1x128xf32>, vector<128x256xf32>, vector<1x256xf32> -> vector<1x256xf32>
    %25 = arith.addf %24, %9 : vector<1x256xf32>
    %26 = vector.extract_strided_slice %25 {offsets = [0, 0], sizes = [1, 128], strides = [1, 1]} : vector<1x256xf32> to vector<1x128xf32>
    %27 = vector.extract_strided_slice %25 {offsets = [0, 128], sizes = [1, 128], strides = [1, 1]} : vector<1x256xf32> to vector<1x128xf32>
    %cst_24 = arith.constant 0xFF800000 : f32
    %28 = vector.broadcast %cst_24 : f32 to vector<1x128xf32>
    %29 = arith.select %12, %26, %28 : vector<1x128xi1>, vector<1x128xf32>
    %cst_25 = arith.constant dense<0xFF800000> : vector<1xf32>
    %30 = vector.multi_reduction <maximumf>, %29, %cst_25 [1] : vector<1x128xf32> to vector<1xf32>
    %31 = vector.shape_cast %30 : vector<1xf32> to vector<1x1xf32>
    %32 = vector.broadcast %31 : vector<1x1xf32> to vector<1x128xf32>
    %33 = arith.subf %29, %32 : vector<1x128xf32>
    %34 = math.exp %33 : vector<1x128xf32>
    %cst_26 = arith.constant dense<0.000000e+00> : vector<1xf32>
    %35 = vector.multi_reduction <add>, %34, %cst_26 [1] : vector<1x128xf32> to vector<1xf32>
    %36 = vector.shape_cast %35 : vector<1xf32> to vector<1x1xf32>
    %37 = vector.broadcast %36 : vector<1x1xf32> to vector<1x128xf32>
    %38 = arith.divf %34, %37 : vector<1x128xf32>
    %39 = arith.index_cast %c0_i32 : i32 to index
    %c0_27 = arith.constant 0 : index
    %40 = vector.load %arg7[%39, %c0_27] : memref<8x128xf32, #tpu.memory_space<vmem>>, vector<1x128xf32>
    tpu.vector_store %arg7[%39, %c0_27], %38 {strides = array<i32>} : memref<8x128xf32, #tpu.memory_space<vmem>>, vector<1x128xf32>,
    %41 = arith.index_cast %c0_i32 : i32 to index
    %c0_28 = arith.constant 0 : index
    %42 = vector.load %arg8[%41, %c0_28] : memref<8x128xf32, #tpu.memory_space<vmem>>, vector<1x128xf32>
    tpu.vector_store %arg8[%41, %c0_28], %27 {strides = array<i32>} : memref<8x128xf32, #tpu.memory_space<vmem>>, vector<1x128xf32>,
    %c1_i32 = arith.constant 1 : i32
    %43 = arith.index_cast %c1_i32 : i32 to index
    %c0_29 = arith.constant 0 : index
    %44 = vector.load %arg9[%43, %c0_29] : memref<8x128xf32, #tpu.memory_space<vmem>>, vector<1x128xf32>
    %cst_30 = arith.constant dense<0.000000e+00> : vector<1x128xf32>
    %45 = tpu.matmul %27, %7, %cst_30 {dimension_numbers = #tpu.dot_dimension_numbers<[1], [0], [0], [1], [0, 0, 1, 1], [], []>} : vector<1x128xf32>, vector<128x128xf32>, vector<1x128xf32> -> vector<1x128xf32>
    %46 = arith.addf %44, %45 : vector<1x128xf32>
    %47 = math.tanh %46 : vector<1x128xf32>
    %48 = math.tanh %47 : vector<1x128xf32>
    %cst_31 = arith.constant dense<0.000000e+00> : vector<1x256xf32>
    %49 = tpu.matmul %48, %8, %cst_31 {dimension_numbers = #tpu.dot_dimension_numbers<[1], [0], [0], [1], [0, 0, 1, 1], [], []>} : vector<1x128xf32>, vector<128x256xf32>, vector<1x256xf32> -> vector<1x256xf32>
    %50 = arith.addf %49, %9 : vector<1x256xf32>
    %51 = vector.extract_strided_slice %50 {offsets = [0, 0], sizes = [1, 128], strides = [1, 1]} : vector<1x256xf32> to vector<1x128xf32>
    %52 = vector.extract_strided_slice %50 {offsets = [0, 128], sizes = [1, 128], strides = [1, 1]} : vector<1x256xf32> to vector<1x128xf32>
    %cst_32 = arith.constant 0xFF800000 : f32
    %53 = vector.broadcast %cst_32 : f32 to vector<1x128xf32>
    %54 = arith.select %12, %51, %53 : vector<1x128xi1>, vector<1x128xf32>
    %cst_33 = arith.constant dense<0xFF800000> : vector<1xf32>
    %55 = vector.multi_reduction <maximumf>, %54, %cst_33 [1] : vector<1x128xf32> to vector<1xf32>
    %56 = vector.shape_cast %55 : vector<1xf32> to vector<1x1xf32>
    %57 = vector.broadcast %56 : vector<1x1xf32> to vector<1x128xf32>
    %58 = arith.subf %54, %57 : vector<1x128xf32>
    %59 = math.exp %58 : vector<1x128xf32>
    %cst_34 = arith.constant dense<0.000000e+00> : vector<1xf32>
    %60 = vector.multi_reduction <add>, %59, %cst_34 [1] : vector<1x128xf32> to vector<1xf32>
    %61 = vector.shape_cast %60 : vector<1xf32> to vector<1x1xf32>
    %62 = vector.broadcast %61 : vector<1x1xf32> to vector<1x128xf32>
    %63 = arith.divf %59, %62 : vector<1x128xf32>
    %64 = arith.index_cast %c1_i32 : i32 to index
    %c0_35 = arith.constant 0 : index
    %65 = vector.load %arg7[%64, %c0_35] : memref<8x128xf32, #tpu.memory_space<vmem>>, vector<1x128xf32>
    tpu.vector_store %arg7[%64, %c0_35], %63 {strides = array<i32>} : memref<8x128xf32, #tpu.memory_space<vmem>>, vector<1x128xf32>,
    %66 = arith.index_cast %c1_i32 : i32 to index
    %c0_36 = arith.constant 0 : index
    %67 = vector.load %arg8[%66, %c0_36] : memref<8x128xf32, #tpu.memory_space<vmem>>, vector<1x128xf32>
    tpu.vector_store %arg8[%66, %c0_36], %52 {strides = array<i32>} : memref<8x128xf32, #tpu.memory_space<vmem>>, vector<1x128xf32>,
    %c2_i32 = arith.constant 2 : i32
    %68 = arith.index_cast %c2_i32 : i32 to index
    %c0_37 = arith.constant 0 : index
    %69 = vector.load %arg9[%68, %c0_37] : memref<8x128xf32, #tpu.memory_space<vmem>>, vector<1x128xf32>
    %cst_38 = arith.constant dense<0.000000e+00> : vector<1x128xf32>
    %70 = tpu.matmul %52, %7, %cst_38 {dimension_numbers = #tpu.dot_dimension_numbers<[1], [0], [0], [1], [0, 0, 1, 1], [], []>} : vector<1x128xf32>, vector<128x128xf32>, vector<1x128xf32> -> vector<1x128xf32>
    %71 = arith.addf %69, %70 : vector<1x128xf32>
    %72 = math.tanh %71 : vector<1x128xf32>
    %73 = math.tanh %72 : vector<1x128xf32>
    %cst_39 = arith.constant dense<0.000000e+00> : vector<1x256xf32>
    %74 = tpu.matmul %73, %8, %cst_39 {dimension_numbers = #tpu.dot_dimension_numbers<[1], [0], [0], [1], [0, 0, 1, 1], [], []>} : vector<1x128xf32>, vector<128x256xf32>, vector<1x256xf32> -> vector<1x256xf32>
    %75 = arith.addf %74, %9 : vector<1x256xf32>
    %76 = vector.extract_strided_slice %75 {offsets = [0, 0], sizes = [1, 128], strides = [1, 1]} : vector<1x256xf32> to vector<1x128xf32>
    %77 = vector.extract_strided_slice %75 {offsets = [0, 128], sizes = [1, 128], strides = [1, 1]} : vector<1x256xf32> to vector<1x128xf32>
    %cst_40 = arith.constant 0xFF800000 : f32
    %78 = vector.broadcast %cst_40 : f32 to vector<1x128xf32>
    %79 = arith.select %12, %76, %78 : vector<1x128xi1>, vector<1x128xf32>
    %cst_41 = arith.constant dense<0xFF800000> : vector<1xf32>
    %80 = vector.multi_reduction <maximumf>, %79, %cst_41 [1] : vector<1x128xf32> to vector<1xf32>
    %81 = vector.shape_cast %80 : vector<1xf32> to vector<1x1xf32>
    %82 = vector.broadcast %81 : vector<1x1xf32> to vector<1x128xf32>
    %83 = arith.subf %79, %82 : vector<1x128xf32>
    %84 = math.exp %83 : vector<1x128xf32>
    %cst_42 = arith.constant dense<0.000000e+00> : vector<1xf32>
    %85 = vector.multi_reduction <add>, %84, %cst_42 [1] : vector<1x128xf32> to vector<1xf32>
    %86 = vector.shape_cast %85 : vector<1xf32> to vector<1x1xf32>
    %87 = vector.broadcast %86 : vector<1x1xf32> to vector<1x128xf32>
    %88 = arith.divf %84, %87 : vector<1x128xf32>
    %89 = arith.index_cast %c2_i32 : i32 to index
    %c0_43 = arith.constant 0 : index
    %90 = vector.load %arg7[%89, %c0_43] : memref<8x128xf32, #tpu.memory_space<vmem>>, vector<1x128xf32>
    tpu.vector_store %arg7[%89, %c0_43], %88 {strides = array<i32>} : memref<8x128xf32, #tpu.memory_space<vmem>>, vector<1x128xf32>,
    %91 = arith.index_cast %c2_i32 : i32 to index
    %c0_44 = arith.constant 0 : index
    %92 = vector.load %arg8[%91, %c0_44] : memref<8x128xf32, #tpu.memory_space<vmem>>, vector<1x128xf32>
    tpu.vector_store %arg8[%91, %c0_44], %77 {strides = array<i32>} : memref<8x128xf32, #tpu.memory_space<vmem>>, vector<1x128xf32>,
    %c3_i32 = arith.constant 3 : i32
    %93 = arith.index_cast %c3_i32 : i32 to index
    %c0_45 = arith.constant 0 : index
    %94 = vector.load %arg9[%93, %c0_45] : memref<8x128xf32, #tpu.memory_space<vmem>>, vector<1x128xf32>
    %cst_46 = arith.constant dense<0.000000e+00> : vector<1x128xf32>
    %95 = tpu.matmul %77, %7, %cst_46 {dimension_numbers = #tpu.dot_dimension_numbers<[1], [0], [0], [1], [0, 0, 1, 1], [], []>} : vector<1x128xf32>, vector<128x128xf32>, vector<1x128xf32> -> vector<1x128xf32>
    %96 = arith.addf %94, %95 : vector<1x128xf32>
    %97 = math.tanh %96 : vector<1x128xf32>
    %98 = math.tanh %97 : vector<1x128xf32>
    %cst_47 = arith.constant dense<0.000000e+00> : vector<1x256xf32>
    %99 = tpu.matmul %98, %8, %cst_47 {dimension_numbers = #tpu.dot_dimension_numbers<[1], [0], [0], [1], [0, 0, 1, 1], [], []>} : vector<1x128xf32>, vector<128x256xf32>, vector<1x256xf32> -> vector<1x256xf32>
    %100 = arith.addf %99, %9 : vector<1x256xf32>
    %101 = vector.extract_strided_slice %100 {offsets = [0, 0], sizes = [1, 128], strides = [1, 1]} : vector<1x256xf32> to vector<1x128xf32>
    %102 = vector.extract_strided_slice %100 {offsets = [0, 128], sizes = [1, 128], strides = [1, 1]} : vector<1x256xf32> to vector<1x128xf32>
    %cst_48 = arith.constant 0xFF800000 : f32
    %103 = vector.broadcast %cst_48 : f32 to vector<1x128xf32>
    %104 = arith.select %12, %101, %103 : vector<1x128xi1>, vector<1x128xf32>
    %cst_49 = arith.constant dense<0xFF800000> : vector<1xf32>
    %105 = vector.multi_reduction <maximumf>, %104, %cst_49 [1] : vector<1x128xf32> to vector<1xf32>
    %106 = vector.shape_cast %105 : vector<1xf32> to vector<1x1xf32>
    %107 = vector.broadcast %106 : vector<1x1xf32> to vector<1x128xf32>
    %108 = arith.subf %104, %107 : vector<1x128xf32>
    %109 = math.exp %108 : vector<1x128xf32>
    %cst_50 = arith.constant dense<0.000000e+00> : vector<1xf32>
    %110 = vector.multi_reduction <add>, %109, %cst_50 [1] : vector<1x128xf32> to vector<1xf32>
    %111 = vector.shape_cast %110 : vector<1xf32> to vector<1x1xf32>
    %112 = vector.broadcast %111 : vector<1x1xf32> to vector<1x128xf32>
    %113 = arith.divf %109, %112 : vector<1x128xf32>
    %114 = arith.index_cast %c3_i32 : i32 to index
    %c0_51 = arith.constant 0 : index
    %115 = vector.load %arg7[%114, %c0_51] : memref<8x128xf32, #tpu.memory_space<vmem>>, vector<1x128xf32>
    tpu.vector_store %arg7[%114, %c0_51], %113 {strides = array<i32>} : memref<8x128xf32, #tpu.memory_space<vmem>>, vector<1x128xf32>,
    %116 = arith.index_cast %c3_i32 : i32 to index
    %c0_52 = arith.constant 0 : index
    %117 = vector.load %arg8[%116, %c0_52] : memref<8x128xf32, #tpu.memory_space<vmem>>, vector<1x128xf32>
    tpu.vector_store %arg8[%116, %c0_52], %102 {strides = array<i32>} : memref<8x128xf32, #tpu.memory_space<vmem>>, vector<1x128xf32>,
    %c4_i32_53 = arith.constant 4 : i32
    %118 = arith.index_cast %c4_i32_53 : i32 to index
    %c0_54 = arith.constant 0 : index
    %119 = vector.load %arg9[%118, %c0_54] : memref<8x128xf32, #tpu.memory_space<vmem>>, vector<1x128xf32>
    %cst_55 = arith.constant dense<0.000000e+00> : vector<1x128xf32>
    %120 = tpu.matmul %102, %7, %cst_55 {dimension_numbers = #tpu.dot_dimension_numbers<[1], [0], [0], [1], [0, 0, 1, 1], [], []>} : vector<1x128xf32>, vector<128x128xf32>, vector<1x128xf32> -> vector<1x128xf32>
    %121 = arith.addf %119, %120 : vector<1x128xf32>
    %122 = math.tanh %121 : vector<1x128xf32>
    %123 = math.tanh %122 : vector<1x128xf32>
    %cst_56 = arith.constant dense<0.000000e+00> : vector<1x256xf32>
    %124 = tpu.matmul %123, %8, %cst_56 {dimension_numbers = #tpu.dot_dimension_numbers<[1], [0], [0], [1], [0, 0, 1, 1], [], []>} : vector<1x128xf32>, vector<128x256xf32>, vector<1x256xf32> -> vector<1x256xf32>
    %125 = arith.addf %124, %9 : vector<1x256xf32>
    %126 = vector.extract_strided_slice %125 {offsets = [0, 0], sizes = [1, 128], strides = [1, 1]} : vector<1x256xf32> to vector<1x128xf32>
    %127 = vector.extract_strided_slice %125 {offsets = [0, 128], sizes = [1, 128], strides = [1, 1]} : vector<1x256xf32> to vector<1x128xf32>
    %cst_57 = arith.constant 0xFF800000 : f32
    %128 = vector.broadcast %cst_57 : f32 to vector<1x128xf32>
    %129 = arith.select %12, %126, %128 : vector<1x128xi1>, vector<1x128xf32>
    %cst_58 = arith.constant dense<0xFF800000> : vector<1xf32>
    %130 = vector.multi_reduction <maximumf>, %129, %cst_58 [1] : vector<1x128xf32> to vector<1xf32>
    %131 = vector.shape_cast %130 : vector<1xf32> to vector<1x1xf32>
    %132 = vector.broadcast %131 : vector<1x1xf32> to vector<1x128xf32>
    %133 = arith.subf %129, %132 : vector<1x128xf32>
    %134 = math.exp %133 : vector<1x128xf32>
    %cst_59 = arith.constant dense<0.000000e+00> : vector<1xf32>
    %135 = vector.multi_reduction <add>, %134, %cst_59 [1] : vector<1x128xf32> to vector<1xf32>
    %136 = vector.shape_cast %135 : vector<1xf32> to vector<1x1xf32>
    %137 = vector.broadcast %136 : vector<1x1xf32> to vector<1x128xf32>
    %138 = arith.divf %134, %137 : vector<1x128xf32>
    %139 = arith.index_cast %c4_i32_53 : i32 to index
    %c0_60 = arith.constant 0 : index
    %140 = vector.load %arg7[%139, %c0_60] : memref<8x128xf32, #tpu.memory_space<vmem>>, vector<1x128xf32>
    tpu.vector_store %arg7[%139, %c0_60], %138 {strides = array<i32>} : memref<8x128xf32, #tpu.memory_space<vmem>>, vector<1x128xf32>,
    %141 = arith.index_cast %c4_i32_53 : i32 to index
    %c0_61 = arith.constant 0 : index
    %142 = vector.load %arg8[%141, %c0_61] : memref<8x128xf32, #tpu.memory_space<vmem>>, vector<1x128xf32>
    tpu.vector_store %arg8[%141, %c0_61], %127 {strides = array<i32>} : memref<8x128xf32, #tpu.memory_space<vmem>>, vector<1x128xf32>,
    %c5_i32 = arith.constant 5 : i32
    %143 = arith.index_cast %c5_i32 : i32 to index
    %c0_62 = arith.constant 0 : index
    %144 = vector.load %arg9[%143, %c0_62] : memref<8x128xf32, #tpu.memory_space<vmem>>, vector<1x128xf32>
    %cst_63 = arith.constant dense<0.000000e+00> : vector<1x128xf32>
    %145 = tpu.matmul %127, %7, %cst_63 {dimension_numbers = #tpu.dot_dimension_numbers<[1], [0], [0], [1], [0, 0, 1, 1], [], []>} : vector<1x128xf32>, vector<128x128xf32>, vector<1x128xf32> -> vector<1x128xf32>
    %146 = arith.addf %144, %145 : vector<1x128xf32>
    %147 = math.tanh %146 : vector<1x128xf32>
    %148 = math.tanh %147 : vector<1x128xf32>
    %cst_64 = arith.constant dense<0.000000e+00> : vector<1x256xf32>
    %149 = tpu.matmul %148, %8, %cst_64 {dimension_numbers = #tpu.dot_dimension_numbers<[1], [0], [0], [1], [0, 0, 1, 1], [], []>} : vector<1x128xf32>, vector<128x256xf32>, vector<1x256xf32> -> vector<1x256xf32>
    %150 = arith.addf %149, %9 : vector<1x256xf32>
    %151 = vector.extract_strided_slice %150 {offsets = [0, 0], sizes = [1, 128], strides = [1, 1]} : vector<1x256xf32> to vector<1x128xf32>
    %152 = vector.extract_strided_slice %150 {offsets = [0, 128], sizes = [1, 128], strides = [1, 1]} : vector<1x256xf32> to vector<1x128xf32>
    %cst_65 = arith.constant 0xFF800000 : f32
    %153 = vector.broadcast %cst_65 : f32 to vector<1x128xf32>
    %154 = arith.select %12, %151, %153 : vector<1x128xi1>, vector<1x128xf32>
    %cst_66 = arith.constant dense<0xFF800000> : vector<1xf32>
    %155 = vector.multi_reduction <maximumf>, %154, %cst_66 [1] : vector<1x128xf32> to vector<1xf32>
    %156 = vector.shape_cast %155 : vector<1xf32> to vector<1x1xf32>
    %157 = vector.broadcast %156 : vector<1x1xf32> to vector<1x128xf32>
    %158 = arith.subf %154, %157 : vector<1x128xf32>
    %159 = math.exp %158 : vector<1x128xf32>
    %cst_67 = arith.constant dense<0.000000e+00> : vector<1xf32>
    %160 = vector.multi_reduction <add>, %159, %cst_67 [1] : vector<1x128xf32> to vector<1xf32>
    %161 = vector.shape_cast %160 : vector<1xf32> to vector<1x1xf32>
    %162 = vector.broadcast %161 : vector<1x1xf32> to vector<1x128xf32>
    %163 = arith.divf %159, %162 : vector<1x128xf32>
    %164 = arith.index_cast %c5_i32 : i32 to index
    %c0_68 = arith.constant 0 : index
    %165 = vector.load %arg7[%164, %c0_68] : memref<8x128xf32, #tpu.memory_space<vmem>>, vector<1x128xf32>
    tpu.vector_store %arg7[%164, %c0_68], %163 {strides = array<i32>} : memref<8x128xf32, #tpu.memory_space<vmem>>, vector<1x128xf32>,
    %166 = arith.index_cast %c5_i32 : i32 to index
    %c0_69 = arith.constant 0 : index
    %167 = vector.load %arg8[%166, %c0_69] : memref<8x128xf32, #tpu.memory_space<vmem>>, vector<1x128xf32>
    tpu.vector_store %arg8[%166, %c0_69], %152 {strides = array<i32>} : memref<8x128xf32, #tpu.memory_space<vmem>>, vector<1x128xf32>,
    %c6_i32 = arith.constant 6 : i32
    %168 = arith.index_cast %c6_i32 : i32 to index
    %c0_70 = arith.constant 0 : index
    %169 = vector.load %arg9[%168, %c0_70] : memref<8x128xf32, #tpu.memory_space<vmem>>, vector<1x128xf32>
    %cst_71 = arith.constant dense<0.000000e+00> : vector<1x128xf32>
    %170 = tpu.matmul %152, %7, %cst_71 {dimension_numbers = #tpu.dot_dimension_numbers<[1], [0], [0], [1], [0, 0, 1, 1], [], []>} : vector<1x128xf32>, vector<128x128xf32>, vector<1x128xf32> -> vector<1x128xf32>
    %171 = arith.addf %169, %170 : vector<1x128xf32>
    %172 = math.tanh %171 : vector<1x128xf32>
    %173 = math.tanh %172 : vector<1x128xf32>
    %cst_72 = arith.constant dense<0.000000e+00> : vector<1x256xf32>
    %174 = tpu.matmul %173, %8, %cst_72 {dimension_numbers = #tpu.dot_dimension_numbers<[1], [0], [0], [1], [0, 0, 1, 1], [], []>} : vector<1x128xf32>, vector<128x256xf32>, vector<1x256xf32> -> vector<1x256xf32>
    %175 = arith.addf %174, %9 : vector<1x256xf32>
    %176 = vector.extract_strided_slice %175 {offsets = [0, 0], sizes = [1, 128], strides = [1, 1]} : vector<1x256xf32> to vector<1x128xf32>
    %177 = vector.extract_strided_slice %175 {offsets = [0, 128], sizes = [1, 128], strides = [1, 1]} : vector<1x256xf32> to vector<1x128xf32>
    %cst_73 = arith.constant 0xFF800000 : f32
    %178 = vector.broadcast %cst_73 : f32 to vector<1x128xf32>
    %179 = arith.select %12, %176, %178 : vector<1x128xi1>, vector<1x128xf32>
    %cst_74 = arith.constant dense<0xFF800000> : vector<1xf32>
    %180 = vector.multi_reduction <maximumf>, %179, %cst_74 [1] : vector<1x128xf32> to vector<1xf32>
    %181 = vector.shape_cast %180 : vector<1xf32> to vector<1x1xf32>
    %182 = vector.broadcast %181 : vector<1x1xf32> to vector<1x128xf32>
    %183 = arith.subf %179, %182 : vector<1x128xf32>
    %184 = math.exp %183 : vector<1x128xf32>
    %cst_75 = arith.constant dense<0.000000e+00> : vector<1xf32>
    %185 = vector.multi_reduction <add>, %184, %cst_75 [1] : vector<1x128xf32> to vector<1xf32>
    %186 = vector.shape_cast %185 : vector<1xf32> to vector<1x1xf32>
    %187 = vector.broadcast %186 : vector<1x1xf32> to vector<1x128xf32>
    %188 = arith.divf %184, %187 : vector<1x128xf32>
    %189 = arith.index_cast %c6_i32 : i32 to index
    %c0_76 = arith.constant 0 : index
    %190 = vector.load %arg7[%189, %c0_76] : memref<8x128xf32, #tpu.memory_space<vmem>>, vector<1x128xf32>
    tpu.vector_store %arg7[%189, %c0_76], %188 {strides = array<i32>} : memref<8x128xf32, #tpu.memory_space<vmem>>, vector<1x128xf32>,
    %191 = arith.index_cast %c6_i32 : i32 to index
    %c0_77 = arith.constant 0 : index
    %192 = vector.load %arg8[%191, %c0_77] : memref<8x128xf32, #tpu.memory_space<vmem>>, vector<1x128xf32>
    tpu.vector_store %arg8[%191, %c0_77], %177 {strides = array<i32>} : memref<8x128xf32, #tpu.memory_space<vmem>>, vector<1x128xf32>,
    %c7_i32 = arith.constant 7 : i32
    %193 = arith.index_cast %c7_i32 : i32 to index
    %c0_78 = arith.constant 0 : index
    %194 = vector.load %arg9[%193, %c0_78] : memref<8x128xf32, #tpu.memory_space<vmem>>, vector<1x128xf32>
    %cst_79 = arith.constant dense<0.000000e+00> : vector<1x128xf32>
    %195 = tpu.matmul %177, %7, %cst_79 {dimension_numbers = #tpu.dot_dimension_numbers<[1], [0], [0], [1], [0, 0, 1, 1], [], []>} : vector<1x128xf32>, vector<128x128xf32>, vector<1x128xf32> -> vector<1x128xf32>
    %196 = arith.addf %194, %195 : vector<1x128xf32>
    %197 = math.tanh %196 : vector<1x128xf32>
    %198 = math.tanh %197 : vector<1x128xf32>
    %cst_80 = arith.constant dense<0.000000e+00> : vector<1x256xf32>
    %199 = tpu.matmul %198, %8, %cst_80 {dimension_numbers = #tpu.dot_dimension_numbers<[1], [0], [0], [1], [0, 0, 1, 1], [], []>} : vector<1x128xf32>, vector<128x256xf32>, vector<1x256xf32> -> vector<1x256xf32>
    %200 = arith.addf %199, %9 : vector<1x256xf32>
    %201 = vector.extract_strided_slice %200 {offsets = [0, 0], sizes = [1, 128], strides = [1, 1]} : vector<1x256xf32> to vector<1x128xf32>
    %202 = vector.extract_strided_slice %200 {offsets = [0, 128], sizes = [1, 128], strides = [1, 1]} : vector<1x256xf32> to vector<1x128xf32>
    %cst_81 = arith.constant 0xFF800000 : f32
    %203 = vector.broadcast %cst_81 : f32 to vector<1x128xf32>
    %204 = arith.select %12, %201, %203 : vector<1x128xi1>, vector<1x128xf32>
    %cst_82 = arith.constant dense<0xFF800000> : vector<1xf32>
    %205 = vector.multi_reduction <maximumf>, %204, %cst_82 [1] : vector<1x128xf32> to vector<1xf32>
    %206 = vector.shape_cast %205 : vector<1xf32> to vector<1x1xf32>
    %207 = vector.broadcast %206 : vector<1x1xf32> to vector<1x128xf32>
    %208 = arith.subf %204, %207 : vector<1x128xf32>
    %209 = math.exp %208 : vector<1x128xf32>
    %cst_83 = arith.constant dense<0.000000e+00> : vector<1xf32>
    %210 = vector.multi_reduction <add>, %209, %cst_83 [1] : vector<1x128xf32> to vector<1xf32>
    %211 = vector.shape_cast %210 : vector<1xf32> to vector<1x1xf32>
    %212 = vector.broadcast %211 : vector<1x1xf32> to vector<1x128xf32>
    %213 = arith.divf %209, %212 : vector<1x128xf32>
    %214 = arith.index_cast %c7_i32 : i32 to index
    %c0_84 = arith.constant 0 : index
    %215 = vector.load %arg7[%214, %c0_84] : memref<8x128xf32, #tpu.memory_space<vmem>>, vector<1x128xf32>
    tpu.vector_store %arg7[%214, %c0_84], %213 {strides = array<i32>} : memref<8x128xf32, #tpu.memory_space<vmem>>, vector<1x128xf32>,
    %216 = arith.index_cast %c7_i32 : i32 to index
    %c0_85 = arith.constant 0 : index
    %217 = vector.load %arg8[%216, %c0_85] : memref<8x128xf32, #tpu.memory_space<vmem>>, vector<1x128xf32>
    tpu.vector_store %arg8[%216, %c0_85], %202 {strides = array<i32>} : memref<8x128xf32, #tpu.memory_space<vmem>>, vector<1x128xf32>,
    %c8_i32 = arith.constant 8 : i32
    return
  }
}

</mosaic_0001>

<llo_original>
// kernel: tpu_custom_call.1
$region0: #{tpu_custom_call.1}
  #allocation0 [shape = 'u32[]', space=smem, size = 0x4, offset = 0x4, fixed_abs, tag = 'smem constant byte address 0x4 - core index']
  #allocation1 [shape = 'u32[144,128]{1,0:T(1,128)}', space=vmem, size = 0x12000, scoped, tag = 'internal scratch']
  #allocation2 [shape = 'f32[8,128]{1,0:T(8,128)}', space=vmem, size = 0x1000, scoped, tag = 'scratch operand']
  %s0 = inlined_call_operand.hbm [shape: f32[8,128], index: 0, kind: input, shape index: {}]
  %s1 = inlined_call_operand.vmem [shape: f32[1,128], index: 1, kind: input, shape index: {}]
  %s2 = inlined_call_operand.hbm [shape: f32[128,128], index: 2, kind: input, shape index: {}]
  %s3 = inlined_call_operand.hbm [shape: f32[128,128], index: 3, kind: input, shape index: {}]
  %s4 = inlined_call_operand.vmem [shape: f32[1,128], index: 4, kind: input, shape index: {}]
  %s5 = inlined_call_operand.hbm [shape: f32[128,256], index: 5, kind: input, shape index: {}]
  %s6 = inlined_call_operand.vmem [shape: f32[1,256], index: 6, kind: input, shape index: {}]
  %s7 = inlined_call_operand.hbm [shape: f32[8,128], index: 7, kind: output, shape index: {0}]
  %s8 = inlined_call_operand.hbm [shape: f32[8,128], index: 8, kind: output, shape index: {1}]
  %9 = xla_tuple %s7, %s8
  %s10 = sld [smem:[#allocation0]]
  $region62: #{tpu_custom_call.1} parent=0
    _
  %s12 = ssub.s32 1, %s10
  %s13 = scalar_select 0, %s12, %s10
  $region1: #{tpu_custom_call.1} parent=0
    #allocation3 [shape = 'u8[4096]{0}', space=vmem, size = 0x1000, scoped, tag = 'input window, operand 0, single buffered']
    #allocation4 [shape = 's32[1]{0}', space=sflag, size = 0x4, scoped, tag = 'scoped memory for tpu_custom_call.1']
    #allocation5 [shape = 's32[1]{0}', space=sflag, size = 0x4, scoped, tag = 'scoped memory for tpu_custom_call.1']
    #allocation6 [shape = 'u8[65536]{0}', space=vmem, size = 0x10000, scoped, tag = 'input window, operand 2, single buffered']
    #allocation7 [shape = 's32[1]{0}', space=sflag, size = 0x4, scoped, tag = 'scoped memory for tpu_custom_call.1']
    #allocation8 [shape = 'u8[65536]{0}', space=vmem, size = 0x10000, scoped, tag = 'input window, operand 3, single buffered']
    #allocation9 [shape = 'u8[131072]{0}', space=vmem, size = 0x20000, scoped, tag = 'input window, operand 5, single buffered']
    #allocation10 [shape = 's32[1]{0}', space=sflag, size = 0x4, scoped, tag = 'scoped memory for tpu_custom_call.1']
    #allocation11 [shape = 'u8[4096]{0}', space=vmem, size = 0x1000, scoped, tag = 'output window, operand 0, single buffered']
    #allocation12 [shape = 'u8[4096]{0}', space=vmem, size = 0x1000, scoped, tag = 'output window, operand 1, single buffered']
    #allocation13 [shape = 's32[1]{0}', space=sflag, size = 0x4, scoped, tag = 'scoped memory for tpu_custom_call.1']
    %14 = vsyncpa [#allocation4], 0
    %15 = vsyncpa [#allocation7], 0
    %16 = vsyncpa [#allocation10], 0
    %17 = vsyncpa [#allocation5], 0
    %18 = vsyncpa [#allocation13], 0
    // Predicated region
    $region2: #{tpu_custom_call.1} parent=1 // pred_check
      _
    $region3: #{tpu_custom_call.1} parent=1 // pred_check_branch
      %20 = sbr.rel (0) target = $region5
    $region4: #{tpu_custom_call.1} parent=1 // pred_region
      %s22 = ssub.s32 128, 128
      %23 = vsyncadd [#allocation4], %s22
      %s25 = sshll.u32 [#allocation3], 4
      %s26 = int_to_ptr.vmem [resolvable:$true] %s25
      %28 = dma.hbm_to_vmem [thread:$0]  %s0, 128, %s26, [#allocation4]
    $region5: #{tpu_custom_call.1} parent=1 // pred_fallthru
      _
    // Predicated region
    $region6: #{tpu_custom_call.1} parent=1 // pred_check
      _
    $region7: #{tpu_custom_call.1} parent=1 // pred_check_branch
      %30 = sbr.rel (0) target = $region9
    $region8: #{tpu_custom_call.1} parent=1 // pred_region
      _
    $region9: #{tpu_custom_call.1} parent=1 // pred_fallthru
      _
    // Predicated region
    $region10: #{tpu_custom_call.1} parent=1 // pred_check
      _
    $region11: #{tpu_custom_call.1} parent=1 // pred_check_branch
      %32 = sbr.rel (0) target = $region13
    $region12: #{tpu_custom_call.1} parent=1 // pred_region
      %s34 = ssub.s32 2048, 2048
      %35 = vsyncadd [#allocation7], %s34
      %s36 = sshll.u32 [#allocation6], 4
      %s37 = int_to_ptr.vmem [resolvable:$true] %s36
      %42 = dma.hbm_to_vmem [thread:$0]  %s2, 2048, %s37, [#allocation7], 128, 128, 8
    $region13: #{tpu_custom_call.1} parent=1 // pred_fallthru
      _
    // Predicated region
    $region14: #{tpu_custom_call.1} parent=1 // pred_check
      _
    $region15: #{tpu_custom_call.1} parent=1 // pred_check_branch
      %44 = sbr.rel (0) target = $region17
    $region16: #{tpu_custom_call.1} parent=1 // pred_region
      %s46 = ssub.s32 2048, 2048
      %47 = vsyncadd [#allocation7], %s46
      %s48 = sshll.u32 [#allocation8], 4
      %s49 = int_to_ptr.vmem [resolvable:$true] %s48
      %54 = dma.hbm_to_vmem [thread:$0]  %s3, 2048, %s49, [#allocation7], 128, 128, 8
    $region17: #{tpu_custom_call.1} parent=1 // pred_fallthru
      _
    // Predicated region
    $region18: #{tpu_custom_call.1} parent=1 // pred_check
      _
    $region19: #{tpu_custom_call.1} parent=1 // pred_check_branch
      %56 = sbr.rel (0) target = $region21
    $region20: #{tpu_custom_call.1} parent=1 // pred_region
      _
    $region21: #{tpu_custom_call.1} parent=1 // pred_fallthru
      _
    // Predicated region
    $region22: #{tpu_custom_call.1} parent=1 // pred_check
      _
    $region23: #{tpu_custom_call.1} parent=1 // pred_check_branch
      %58 = sbr.rel (0) target = $region25
    $region24: #{tpu_custom_call.1} parent=1 // pred_region
      %s60 = ssub.s32 4096, 4096
      %61 = vsyncadd [#allocation10], %s60
      %s62 = sshll.u32 [#allocation9], 4
      %s63 = int_to_ptr.vmem [resolvable:$true] %s62
      %68 = dma.hbm_to_vmem [thread:$0]  %s5, 4096, %s63, [#allocation10], 256, 256, 16
    $region25: #{tpu_custom_call.1} parent=1 // pred_fallthru
      _
    // Predicated region
    $region26: #{tpu_custom_call.1} parent=1 // pred_check
      _
    $region27: #{tpu_custom_call.1} parent=1 // pred_check_branch
      %70 = sbr.rel (0) target = $region29
    $region28: #{tpu_custom_call.1} parent=1 // pred_region
      _
    $region29: #{tpu_custom_call.1} parent=1 // pred_fallthru
      _
    // Predicated region
    $region30: #{tpu_custom_call.1} parent=1 // pred_check
      _
    $region31: #{tpu_custom_call.1} parent=1 // pred_check_branch
      %72 = sbr.rel (0) target = $region33
    $region32: #{tpu_custom_call.1} parent=1 // pred_region
      %73 = dma.done [#allocation4], 128
    $region33: #{tpu_custom_call.1} parent=1 // pred_fallthru
      _
    // Predicated region
    $region34: #{tpu_custom_call.1} parent=1 // pred_check
      _
    $region35: #{tpu_custom_call.1} parent=1 // pred_check_branch
      %75 = sbr.rel (0) target = $region37
    $region36: #{tpu_custom_call.1} parent=1 // pred_region
      %76 = dma.done [#allocation7], 2048
    $region37: #{tpu_custom_call.1} parent=1 // pred_fallthru
      _
    // Predicated region
    $region38: #{tpu_custom_call.1} parent=1 // pred_check
      _
    $region39: #{tpu_custom_call.1} parent=1 // pred_check_branch
      %78 = sbr.rel (0) target = $region41
    $region40: #{tpu_custom_call.1} parent=1 // pred_region
      %79 = dma.done [#allocation7], 2048
    $region41: #{tpu_custom_call.1} parent=1 // pred_fallthru
      _
    // Predicated region
    $region42: #{tpu_custom_call.1} parent=1 // pred_check
      _
    $region43: #{tpu_custom_call.1} parent=1 // pred_check_branch
      %81 = sbr.rel (0) target = $region45
    $region44: #{tpu_custom_call.1} parent=1 // pred_region
      %82 = dma.done [#allocation10], 4096
    $region45: #{tpu_custom_call.1} parent=1 // pred_fallthru
      _
    %v83 = vld [vmem:[#allocation3] sm:$0xff]
    %v84 = vld [vmem:[#allocation6] sm:$0xff]
    %v85 = vld [vmem:[#allocation6 + $0x8] sm:$0xff]
    %v86 = vld [vmem:[#allocation6 + $0x10] sm:$0xff]
    %v87 = vld [vmem:[#allocation6 + $0x18] sm:$0xff]
    %v88 = vld [vmem:[#allocation6 + $0x20] sm:$0xff]
    %v89 = vld [vmem:[#allocation6 + $0x28] sm:$0xff]
    %v90 = vld [vmem:[#allocation6 + $0x30] sm:$0xff]
    %v91 = vld [vmem:[#allocation6 + $0x38] sm:$0xff]
    %v92 = vld [vmem:[#allocation6 + $0x40] sm:$0xff]
    %v93 = vld [vmem:[#allocation6 + $0x48] sm:$0xff]
    %v94 = vld [vmem:[#allocation6 + $0x50] sm:$0xff]
    %v95 = vld [vmem:[#allocation6 + $0x58] sm:$0xff]
    %v96 = vld [vmem:[#allocation6 + $0x60] sm:$0xff]
    %v97 = vld [vmem:[#allocation6 + $0x68] sm:$0xff]
    %v98 = vld [vmem:[#allocation6 + $0x70] sm:$0xff]
    %v99 = vld [vmem:[#allocation6 + $0x78] sm:$0xff]
    %v100 = vld [vmem:[%s4] sm:$0x1]
    %v102 = vlaneseq
    %v103 = vshrl.u32 %v102, 7
    %v104 = vsub.s32 0, %v103
    %v105 = vrot.slane %v100, %v104
    %107 = vmatprep.subr.mxu0 0.0
    %108 = vmatpush1.msra.mxu0 %v99
    %109 = vmatprep.subr.mxu0 0.0
    %110 = vmatpush1.msra.mxu0 %v98
    %111 = vmatprep.subr.mxu0 0.0
    %112 = vmatpush1.msra.mxu0 %v97
    %113 = vmatprep.subr.mxu0 0.0
    %114 = vmatpush1.msra.mxu0 %v96
    %115 = vmatprep.subr.mxu0 0.0
    %116 = vmatpush1.msra.mxu0 %v95
    %117 = vmatprep.subr.mxu0 0.0
    %118 = vmatpush1.msra.mxu0 %v94
    %119 = vmatprep.subr.mxu0 0.0
    %120 = vmatpush1.msra.mxu0 %v93
    %121 = vmatprep.subr.mxu0 0.0
    %122 = vmatpush1.msra.mxu0 %v92
    %123 = vmatprep.subr.mxu0 0.0
    %124 = vmatpush1.msra.mxu0 %v91
    %125 = vmatprep.subr.mxu0 0.0
    %126 = vmatpush1.msra.mxu0 %v90
    %127 = vmatprep.subr.mxu0 0.0
    %128 = vmatpush1.msra.mxu0 %v89
    %129 = vmatprep.subr.mxu0 0.0
    %130 = vmatpush1.msra.mxu0 %v88
    %131 = vmatprep.subr.mxu0 0.0
    %132 = vmatpush1.msra.mxu0 %v87
    %133 = vmatprep.subr.mxu0 0.0
    %134 = vmatpush1.msra.mxu0 %v86
    %135 = vmatprep.subr.mxu0 0.0
    %136 = vmatpush1.msra.mxu0 %v85
    %137 = vmatprep.subr.mxu0 0.0
    %138 = vmatpush1.msra.mxu0 %v84
    %139 = vmatprep.subr.mxu0 0.0
    %140 = vmatpush2.msra.mxu0 0.0
    %141 = vmatprep.subr.mxu0 0.0
    %142 = vmatpush2.msra.mxu0 0.0
    %143 = vmatprep.subr.mxu0 0.0
    %144 = vmatpush2.msra.mxu0 0.0
    %145 = vmatprep.subr.mxu0 0.0
    %146 = vmatpush2.msra.mxu0 0.0
    %147 = vmatprep.subr.mxu0 0.0
    %148 = vmatpush2.msra.mxu0 0.0
    %149 = vmatprep.subr.mxu0 0.0
    %150 = vmatpush2.msra.mxu0 0.0
    %151 = vmatprep.subr.mxu0 0.0
    %152 = vmatpush2.msra.mxu0 0.0
    %153 = vmatprep.subr.mxu0 0.0
    %154 = vmatpush2.msra.mxu0 0.0
    %155 = vmatprep.subr.mxu0 0.0
    %156 = vmatpush2.msra.mxu0 0.0
    %157 = vmatprep.subr.mxu0 0.0
    %158 = vmatpush2.msra.mxu0 0.0
    %159 = vmatprep.subr.mxu0 0.0
    %160 = vmatpush2.msra.mxu0 0.0
    %161 = vmatprep.subr.mxu0 0.0
    %162 = vmatpush2.msra.mxu0 0.0
    %163 = vmatprep.subr.mxu0 0.0
    %164 = vmatpush2.msra.mxu0 0.0
    %165 = vmatprep.subr.mxu0 0.0
    %166 = vmatpush2.msra.mxu0 0.0
    %167 = vmatprep.subr.mxu0 0.0
    %168 = vmatpush2.msra.mxu0 0.0
    %169 = vmatprep.subr.mxu0 0.0
    %170 = vmatpush2.msra.mxu0 0.0
    %171 = vmatprep.mubr.f32.mxu0 0.0
    %172 = vmatmul.mubr.f32.gmra.mxu0 %v83
    %v173 = vpop.f32.mrf.mxu0
    %v174 = vadd.f32 %v105, %v173
    %v175 = vpop.f32.mrf.mxu0
    %176 = vdwg.mxu0
    %177 = vst [vmem:[#allocation2] sm:$0xff] %v174
    %v178 = vld [vmem:[#allocation8] sm:$0xff]
    %v179 = vld [vmem:[#allocation8 + $0x8] sm:$0xff]
    %v180 = vld [vmem:[#allocation8 + $0x10] sm:$0xff]
    %v181 = vld [vmem:[#allocation8 + $0x18] sm:$0xff]
    %v182 = vld [vmem:[#allocation8 + $0x20] sm:$0xff]
    %v183 = vld [vmem:[#allocation8 + $0x28] sm:$0xff]
    %v184 = vld [vmem:[#allocation8 + $0x30] sm:$0xff]
    %v185 = vld [vmem:[#allocation8 + $0x38] sm:$0xff]
    %v186 = vld [vmem:[#allocation8 + $0x40] sm:$0xff]
    %v187 = vld [vmem:[#allocation8 + $0x48] sm:$0xff]
    %v188 = vld [vmem:[#allocation8 + $0x50] sm:$0xff]
    %v189 = vld [vmem:[#allocation8 + $0x58] sm:$0xff]
    %v190 = vld [vmem:[#allocation8 + $0x60] sm:$0xff]
    %v191 = vld [vmem:[#allocation8 + $0x68] sm:$0xff]
    %v192 = vld [vmem:[#allocation8 + $0x70] sm:$0xff]
    %v193 = vld [vmem:[#allocation8 + $0x78] sm:$0xff]
    %v194 = vld [vmem:[#allocation9] sm:$0xff]
    %v195 = vld [vmem:[#allocation9 + $0x8] sm:$0xff]
    %v196 = vld [vmem:[#allocation9 + $0x10] sm:$0xff]
    %v197 = vld [vmem:[#allocation9 + $0x18] sm:$0xff]
    %v198 = vld [vmem:[#allocation9 + $0x20] sm:$0xff]
    %v199 = vld [vmem:[#allocation9 + $0x28] sm:$0xff]
    %v200 = vld [vmem:[#allocation9 + $0x30] sm:$0xff]
    %v201 = vld [vmem:[#allocation9 + $0x38] sm:$0xff]
    %v202 = vld [vmem:[#allocation9 + $0x40] sm:$0xff]
    %v203 = vld [vmem:[#allocation9 + $0x48] sm:$0xff]
    %v204 = vld [vmem:[#allocation9 + $0x50] sm:$0xff]
    %v205 = vld [vmem:[#allocation9 + $0x58] sm:$0xff]
    %v206 = vld [vmem:[#allocation9 + $0x60] sm:$0xff]
    %v207 = vld [vmem:[#allocation9 + $0x68] sm:$0xff]
    %v208 = vld [vmem:[#allocation9 + $0x70] sm:$0xff]
    %v209 = vld [vmem:[#allocation9 + $0x78] sm:$0xff]
    %v210 = vld [vmem:[#allocation9 + $0x80] sm:$0xff]
    %v211 = vld [vmem:[#allocation9 + $0x88] sm:$0xff]
    %v212 = vld [vmem:[#allocation9 + $0x90] sm:$0xff]
    %v213 = vld [vmem:[#allocation9 + $0x98] sm:$0xff]
    %v214 = vld [vmem:[#allocation9 + $0xa0] sm:$0xff]
    %v215 = vld [vmem:[#allocation9 + $0xa8] sm:$0xff]
    %v216 = vld [vmem:[#allocation9 + $0xb0] sm:$0xff]
    %v217 = vld [vmem:[#allocation9 + $0xb8] sm:$0xff]
    %v218 = vld [vmem:[#allocation9 + $0xc0] sm:$0xff]
    %v219 = vld [vmem:[#allocation9 + $0xc8] sm:$0xff]
    %v220 = vld [vmem:[#allocation9 + $0xd0] sm:$0xff]
    %v221 = vld [vmem:[#allocation9 + $0xd8] sm:$0xff]
    %v222 = vld [vmem:[#allocation9 + $0xe0] sm:$0xff]
    %v223 = vld [vmem:[#allocation9 + $0xe8] sm:$0xff]
    %v224 = vld [vmem:[#allocation9 + $0xf0] sm:$0xff]
    %v225 = vld [vmem:[#allocation9 + $0xf8] sm:$0xff]
    %v226 = vld [vmem:[%s6] sm:$0x3]
    %v227 = vlaneseq
    %v228 = vand.u32 %v227, 127
    %vm229 = vcmp.lt.s32.totalorder %v228, 4
    %230 = vst [vmem:[#allocation11] sm:$0xff] 0.0
    %231 = vst [vmem:[#allocation12] sm:$0xff] 0.0
    %v232 = vld [vmem:[%s1] sm:$0x1]
    %v233 = vld [vmem:[#allocation2] sm:$0x1]
    %234 = vmatprep.subr.mxu0 0.0
    %235 = vmatpush1.msra.mxu0 %v193
    %236 = vmatprep.subr.mxu0 0.0
    %237 = vmatpush1.msra.mxu0 %v192
    %238 = vmatprep.subr.mxu0 0.0
    %239 = vmatpush1.msra.mxu0 %v191
    %240 = vmatprep.subr.mxu0 0.0
    %241 = vmatpush1.msra.mxu0 %v190
    %242 = vmatprep.subr.mxu0 0.0
    %243 = vmatpush1.msra.mxu0 %v189
    %244 = vmatprep.subr.mxu0 0.0
    %245 = vmatpush1.msra.mxu0 %v188
    %246 = vmatprep.subr.mxu0 0.0
    %247 = vmatpush1.msra.mxu0 %v187
    %248 = vmatprep.subr.mxu0 0.0
    %249 = vmatpush1.msra.mxu0 %v186
    %250 = vmatprep.subr.mxu0 0.0
    %251 = vmatpush1.msra.mxu0 %v185
    %252 = vmatprep.subr.mxu0 0.0
    %253 = vmatpush1.msra.mxu0 %v184
    %254 = vmatprep.subr.mxu0 0.0
    %255 = vmatpush1.msra.mxu0 %v183
    %256 = vmatprep.subr.mxu0 0.0
    %257 = vmatpush1.msra.mxu0 %v182
    %258 = vmatprep.subr.mxu0 0.0
    %259 = vmatpush1.msra.mxu0 %v181
    %260 = vmatprep.subr.mxu0 0.0
    %261 = vmatpush1.msra.mxu0 %v180
    %262 = vmatprep.subr.mxu0 0.0
    %263 = vmatpush1.msra.mxu0 %v179
    %264 = vmatprep.subr.mxu0 0.0
    %265 = vmatpush1.msra.mxu0 %v178
    %266 = vmatprep.subr.mxu0 0.0
    %267 = vmatpush2.msra.mxu0 0.0
    %268 = vmatprep.subr.mxu0 0.0
    %269 = vmatpush2.msra.mxu0 0.0
    %270 = vmatprep.subr.mxu0 0.0
    %271 = vmatpush2.msra.mxu0 0.0
    %272 = vmatprep.subr.mxu0 0.0
    %273 = vmatpush2.msra.mxu0 0.0
    %274 = vmatprep.subr.mxu0 0.0
    %275 = vmatpush2.msra.mxu0 0.0
    %276 = vmatprep.subr.mxu0 0.0
    %277 = vmatpush2.msra.mxu0 0.0
    %278 = vmatprep.subr.mxu0 0.0
    %279 = vmatpush2.msra.mxu0 0.0
    %280 = vmatprep.subr.mxu0 0.0
    %281 = vmatpush2.msra.mxu0 0.0
    %282 = vmatprep.subr.mxu0 0.0
    %283 = vmatpush2.msra.mxu0 0.0
    %284 = vmatprep.subr.mxu0 0.0
    %285 = vmatpush2.msra.mxu0 0.0
    %286 = vmatprep.subr.mxu0 0.0
    %287 = vmatpush2.msra.mxu0 0.0
    %288 = vmatprep.subr.mxu0 0.0
    %289 = vmatpush2.msra.mxu0 0.0
    %290 = vmatprep.subr.mxu0 0.0
    %291 = vmatpush2.msra.mxu0 0.0
    %292 = vmatprep.subr.mxu0 0.0
    %293 = vmatpush2.msra.mxu0 0.0
    %294 = vmatprep.subr.mxu0 0.0
    %295 = vmatpush2.msra.mxu0 0.0
    %296 = vmatprep.subr.mxu0 0.0
    %297 = vmatpush2.msra.mxu0 0.0
    %298 = vmatprep.mubr.f32.mxu0 0.0
    %299 = vmatmul.mubr.f32.gmra.mxu0 %v232
    %v300 = vpop.f32.mrf.mxu0
    %v301 = vadd.f32 0.0, %v300
    %v302 = vpop.f32.mrf.mxu0
    %303 = vdwg.mxu0
    %v304 = vadd.f32 %v233, %v301
    %v305 = vtanh.pop %v304
    %v306 = vtanh.pop %v305
    %v308 = vlaneseq
    %v309 = vshrl.u32 %v308, 7
    %v310 = vsub.s32 0, %v309
    %v311 = vrot.slane %v226, %v310
    %v312 = vlaneseq
    %v313 = vshrl.u32 %v312, 7
    %v314 = vsub.s32 1, %v313
    %v315 = vrot.slane %v226, %v314
    %318 = vmatprep.subr.mxu0 %v225
    %319 = vmatpush1.msra.mxu0 %v224
    %320 = vmatprep.subr.mxu0 %v223
    %321 = vmatpush1.msra.mxu0 %v222
    %322 = vmatprep.subr.mxu0 %v221
    %323 = vmatpush1.msra.mxu0 %v220
    %324 = vmatprep.subr.mxu0 %v219
    %325 = vmatpush1.msra.mxu0 %v218
    %326 = vmatprep.subr.mxu0 %v217
    %327 = vmatpush1.msra.mxu0 %v216
    %328 = vmatprep.subr.mxu0 %v215
    %329 = vmatpush1.msra.mxu0 %v214
    %330 = vmatprep.subr.mxu0 %v213
    %331 = vmatpush1.msra.mxu0 %v212
    %332 = vmatprep.subr.mxu0 %v211
    %333 = vmatpush1.msra.mxu0 %v210
    %334 = vmatprep.subr.mxu0 %v209
    %335 = vmatpush1.msra.mxu0 %v208
    %336 = vmatprep.subr.mxu0 %v207
    %337 = vmatpush1.msra.mxu0 %v206
    %338 = vmatprep.subr.mxu0 %v205
    %339 = vmatpush1.msra.mxu0 %v204
    %340 = vmatprep.subr.mxu0 %v203
    %341 = vmatpush1.msra.mxu0 %v202
    %342 = vmatprep.subr.mxu0 %v201
    %343 = vmatpush1.msra.mxu0 %v200
    %344 = vmatprep.subr.mxu0 %v199
    %345 = vmatpush1.msra.mxu0 %v198
    %346 = vmatprep.subr.mxu0 %v197
    %347 = vmatpush1.msra.mxu0 %v196
    %348 = vmatprep.subr.mxu0 %v195
    %349 = vmatpush1.msra.mxu0 %v194
    %350 = vmatprep.subr.mxu0 0.0
    %351 = vmatpush2.msra.mxu0 0.0
    %352 = vmatprep.subr.mxu0 0.0
    %353 = vmatpush2.msra.mxu0 0.0
    %354 = vmatprep.subr.mxu0 0.0
    %355 = vmatpush2.msra.mxu0 0.0
    %356 = vmatprep.subr.mxu0 0.0
    %357 = vmatpush2.msra.mxu0 0.0
    %358 = vmatprep.subr.mxu0 0.0
    %359 = vmatpush2.msra.mxu0 0.0
    %360 = vmatprep.subr.mxu0 0.0
    %361 = vmatpush2.msra.mxu0 0.0
    %362 = vmatprep.subr.mxu0 0.0
    %363 = vmatpush2.msra.mxu0 0.0
    %364 = vmatprep.subr.mxu0 0.0
    %365 = vmatpush2.msra.mxu0 0.0
    %366 = vmatprep.subr.mxu0 0.0
    %367 = vmatpush2.msra.mxu0 0.0
    %368 = vmatprep.subr.mxu0 0.0
    %369 = vmatpush2.msra.mxu0 0.0
    %370 = vmatprep.subr.mxu0 0.0
    %371 = vmatpush2.msra.mxu0 0.0
    %372 = vmatprep.subr.mxu0 0.0
    %373 = vmatpush2.msra.mxu0 0.0
    %374 = vmatprep.subr.mxu0 0.0
    %375 = vmatpush2.msra.mxu0 0.0
    %376 = vmatprep.subr.mxu0 0.0
    %377 = vmatpush2.msra.mxu0 0.0
    %378 = vmatprep.subr.mxu0 0.0
    %379 = vmatpush2.msra.mxu0 0.0
    %380 = vmatprep.subr.mxu0 0.0
    %381 = vmatpush2.msra.mxu0 0.0
    %382 = vmatprep.mubr.f32.mxu0 0.0
    %383 = vmatmul.mubr.f32.gmra.mxu0 %v306
    %v384 = vpop.f32.mrf.mxu0
    %v385 = vadd.f32 %v311, %v384
    %v386 = vpop.f32.mrf.mxu0
    %v387 = vadd.f32 %v315, %v386
    %388 = vdwg.mxu0
    %v389 = vsel %vm229, %v385, -inf
    %vm390 = vcmask 1040384
    %v391 = vsel %vm390, %v389, -inf
    %392 = vmax.xlane.f32.xlu0 %v391
    %v393 = vpop.xlane.xlu0 %392
    %v394 = vsub.f32 %v389, %v393
    %v395 = vmul.f32 %v394, 1.442695
    %v396 = vpow.pop %v395
    %v397 = vsel %vm390, %v396, 0.0
    %398 = vadd.xlane.f32.xlu0 %v397
    %v399 = vpop.xlane.xlu0 %398
    %v400 = vrcp.pop %v399
    %v401 = vmul.f32 %v396, %v400
    %402 = vst [vmem:[#allocation11] sm:$0x1] %v401
    %403 = vst [vmem:[#allocation12] sm:$0x1] %v387
    %v404 = vld [vmem:[#allocation2 + $0x1] sm:$0x1]
    %405 = vmatprep.subr.mxu0 0.0
    %406 = vmatpush1.msra.mxu0 %v193
    %407 = vmatprep.subr.mxu0 0.0
    %408 = vmatpush1.msra.mxu0 %v192
    %409 = vmatprep.subr.mxu0 0.0
    %410 = vmatpush1.msra.mxu0 %v191
    %411 = vmatprep.subr.mxu0 0.0
    %412 = vmatpush1.msra.mxu0 %v190
    %413 = vmatprep.subr.mxu0 0.0
    %414 = vmatpush1.msra.mxu0 %v189
    %415 = vmatprep.subr.mxu0 0.0
    %416 = vmatpush1.msra.mxu0 %v188
    %417 = vmatprep.subr.mxu0 0.0
    %418 = vmatpush1.msra.mxu0 %v187
    %419 = vmatprep.subr.mxu0 0.0
    %420 = vmatpush1.msra.mxu0 %v186
    %421 = vmatprep.subr.mxu0 0.0
    %422 = vmatpush1.msra.mxu0 %v185
    %423 = vmatprep.subr.mxu0 0.0
    %424 = vmatpush1.msra.mxu0 %v184
    %425 = vmatprep.subr.mxu0 0.0
    %426 = vmatpush1.msra.mxu0 %v183
    %427 = vmatprep.subr.mxu0 0.0
    %428 = vmatpush1.msra.mxu0 %v182
    %429 = vmatprep.subr.mxu0 0.0
    %430 = vmatpush1.msra.mxu0 %v181
    %431 = vmatprep.subr.mxu0 0.0
    %432 = vmatpush1.msra.mxu0 %v180
    %433 = vmatprep.subr.mxu0 0.0
    %434 = vmatpush1.msra.mxu0 %v179
    %435 = vmatprep.subr.mxu0 0.0
    %436 = vmatpush1.msra.mxu0 %v178
    %437 = vmatprep.subr.mxu0 0.0
    %438 = vmatpush2.msra.mxu0 0.0
    %439 = vmatprep.subr.mxu0 0.0
    %440 = vmatpush2.msra.mxu0 0.0
    %441 = vmatprep.subr.mxu0 0.0
    %442 = vmatpush2.msra.mxu0 0.0
    %443 = vmatprep.subr.mxu0 0.0
    %444 = vmatpush2.msra.mxu0 0.0
    %445 = vmatprep.subr.mxu0 0.0
    %446 = vmatpush2.msra.mxu0 0.0
    %447 = vmatprep.subr.mxu0 0.0
    %448 = vmatpush2.msra.mxu0 0.0
    %449 = vmatprep.subr.mxu0 0.0
    %450 = vmatpush2.msra.mxu0 0.0
    %451 = vmatprep.subr.mxu0 0.0
    %452 = vmatpush2.msra.mxu0 0.0
    %453 = vmatprep.subr.mxu0 0.0
    %454 = vmatpush2.msra.mxu0 0.0
    %455 = vmatprep.subr.mxu0 0.0
    %456 = vmatpush2.msra.mxu0 0.0
    %457 = vmatprep.subr.mxu0 0.0
    %458 = vmatpush2.msra.mxu0 0.0
    %459 = vmatprep.subr.mxu0 0.0
    %460 = vmatpush2.msra.mxu0 0.0
    %461 = vmatprep.subr.mxu0 0.0
    %462 = vmatpush2.msra.mxu0 0.0
    %463 = vmatprep.subr.mxu0 0.0
    %464 = vmatpush2.msra.mxu0 0.0
    %465 = vmatprep.subr.mxu0 0.0
    %466 = vmatpush2.msra.mxu0 0.0
    %467 = vmatprep.subr.mxu0 0.0
    %468 = vmatpush2.msra.mxu0 0.0
    %469 = vmatprep.mubr.f32.mxu0 0.0
    %470 = vmatmul.mubr.f32.gmra.mxu0 %v387
    %v471 = vpop.f32.mrf.mxu0
    %v472 = vadd.f32 0.0, %v471
    %v473 = vpop.f32.mrf.mxu0
    %474 = vdwg.mxu0
    %v475 = vadd.f32 %v404, %v472
    %v476 = vtanh.pop %v475
    %v477 = vtanh.pop %v476
    %478 = vmatprep.subr.mxu0 %v225
    %479 = vmatpush1.msra.mxu0 %v224
    %480 = vmatprep.subr.mxu0 %v223
    %481 = vmatpush1.msra.mxu0 %v222
    %482 = vmatprep.subr.mxu0 %v221
    %483 = vmatpush1.msra.mxu0 %v220
    %484 = vmatprep.subr.mxu0 %v219
    %485 = vmatpush1.msra.mxu0 %v218
    %486 = vmatprep.subr.mxu0 %v217
    %487 = vmatpush1.msra.mxu0 %v216
    %488 = vmatprep.subr.mxu0 %v215
    %489 = vmatpush1.msra.mxu0 %v214
    %490 = vmatprep.subr.mxu0 %v213
    %491 = vmatpush1.msra.mxu0 %v212
    %492 = vmatprep.subr.mxu0 %v211
    %493 = vmatpush1.msra.mxu0 %v210
    %494 = vmatprep.subr.mxu0 %v209
    %495 = vmatpush1.msra.mxu0 %v208
    %496 = vmatprep.subr.mxu0 %v207
    %497 = vmatpush1.msra.mxu0 %v206
    %498 = vmatprep.subr.mxu0 %v205
    %499 = vmatpush1.msra.mxu0 %v204
    %500 = vmatprep.subr.mxu0 %v203
    %501 = vmatpush1.msra.mxu0 %v202
    %502 = vmatprep.subr.mxu0 %v201
    %503 = vmatpush1.msra.mxu0 %v200
    %504 = vmatprep.subr.mxu0 %v199
    %505 = vmatpush1.msra.mxu0 %v198
    %506 = vmatprep.subr.mxu0 %v197
    %507 = vmatpush1.msra.mxu0 %v196
    %508 = vmatprep.subr.mxu0 %v195
    %509 = vmatpush1.msra.mxu0 %v194
    %510 = vmatprep.subr.mxu0 0.0
    %511 = vmatpush2.msra.mxu0 0.0
    %512 = vmatprep.subr.mxu0 0.0
    %513 = vmatpush2.msra.mxu0 0.0
    %514 = vmatprep.subr.mxu0 0.0
    %515 = vmatpush2.msra.mxu0 0.0
    %516 = vmatprep.subr.mxu0 0.0
    %517 = vmatpush2.msra.mxu0 0.0
    %518 = vmatprep.subr.mxu0 0.0
    %519 = vmatpush2.msra.mxu0 0.0
    %520 = vmatprep.subr.mxu0 0.0
    %521 = vmatpush2.msra.mxu0 0.0
    %522 = vmatprep.subr.mxu0 0.0
    %523 = vmatpush2.msra.mxu0 0.0
    %524 = vmatprep.subr.mxu0 0.0
    %525 = vmatpush2.msra.mxu0 0.0
    %526 = vmatprep.subr.mxu0 0.0
    %527 = vmatpush2.msra.mxu0 0.0
    %528 = vmatprep.subr.mxu0 0.0
    %529 = vmatpush2.msra.mxu0 0.0
    %530 = vmatprep.subr.mxu0 0.0
    %531 = vmatpush2.msra.mxu0 0.0
    %532 = vmatprep.subr.mxu0 0.0
    %533 = vmatpush2.msra.mxu0 0.0
    %534 = vmatprep.subr.mxu0 0.0
    %535 = vmatpush2.msra.mxu0 0.0
    %536 = vmatprep.subr.mxu0 0.0
    %537 = vmatpush2.msra.mxu0 0.0
    %538 = vmatprep.subr.mxu0 0.0
    %539 = vmatpush2.msra.mxu0 0.0
    %540 = vmatprep.subr.mxu0 0.0
    %541 = vmatpush2.msra.mxu0 0.0
    %542 = vmatprep.mubr.f32.mxu0 0.0
    %543 = vmatmul.mubr.f32.gmra.mxu0 %v477
    %v544 = vpop.f32.mrf.mxu0
    %v545 = vadd.f32 %v311, %v544
    %v546 = vpop.f32.mrf.mxu0
    %v547 = vadd.f32 %v315, %v546
    %548 = vdwg.mxu0
    %v549 = vsel %vm229, %v545, -inf
    %v550 = vsel %vm390, %v549, -inf
    %551 = vmax.xlane.f32.xlu0 %v550
    %v552 = vpop.xlane.xlu0 %551
    %v553 = vsub.f32 %v549, %v552
    %v554 = vmul.f32 %v553, 1.442695
    %v555 = vpow.pop %v554
    %v556 = vsel %vm390, %v555, 0.0
    %557 = vadd.xlane.f32.xlu0 %v556
    %v558 = vpop.xlane.xlu0 %557
    %v559 = vrcp.pop %v558
    %v560 = vmul.f32 %v555, %v559
    %561 = vst [vmem:[#allocation11 + $0x1] sm:$0x1] %v560
    %562 = vst [vmem:[#allocation12 + $0x1] sm:$0x1] %v547
    %v563 = vld [vmem:[#allocation2 + $0x2] sm:$0x1]
    %564 = vmatprep.subr.mxu0 0.0
    %565 = vmatpush1.msra.mxu0 %v193
    %566 = vmatprep.subr.mxu0 0.0
    %567 = vmatpush1.msra.mxu0 %v192
    %568 = vmatprep.subr.mxu0 0.0
    %569 = vmatpush1.msra.mxu0 %v191
    %570 = vmatprep.subr.mxu0 0.0
    %571 = vmatpush1.msra.mxu0 %v190
    %572 = vmatprep.subr.mxu0 0.0
    %573 = vmatpush1.msra.mxu0 %v189
    %574 = vmatprep.subr.mxu0 0.0
    %575 = vmatpush1.msra.mxu0 %v188
    %576 = vmatprep.subr.mxu0 0.0
    %577 = vmatpush1.msra.mxu0 %v187
    %578 = vmatprep.subr.mxu0 0.0
    %579 = vmatpush1.msra.mxu0 %v186
    %580 = vmatprep.subr.mxu0 0.0
    %581 = vmatpush1.msra.mxu0 %v185
    %582 = vmatprep.subr.mxu0 0.0
    %583 = vmatpush1.msra.mxu0 %v184
    %584 = vmatprep.subr.mxu0 0.0
    %585 = vmatpush1.msra.mxu0 %v183
    %586 = vmatprep.subr.mxu0 0.0
    %587 = vmatpush1.msra.mxu0 %v182
    %588 = vmatprep.subr.mxu0 0.0
    %589 = vmatpush1.msra.mxu0 %v181
    %590 = vmatprep.subr.mxu0 0.0
    %591 = vmatpush1.msra.mxu0 %v180
    %592 = vmatprep.subr.mxu0 0.0
    %593 = vmatpush1.msra.mxu0 %v179
    %594 = vmatprep.subr.mxu0 0.0
    %595 = vmatpush1.msra.mxu0 %v178
    %596 = vmatprep.subr.mxu0 0.0
    %597 = vmatpush2.msra.mxu0 0.0
    %598 = vmatprep.subr.mxu0 0.0
    %599 = vmatpush2.msra.mxu0 0.0
    %600 = vmatprep.subr.mxu0 0.0
    %601 = vmatpush2.msra.mxu0 0.0
    %602 = vmatprep.subr.mxu0 0.0
    %603 = vmatpush2.msra.mxu0 0.0
    %604 = vmatprep.subr.mxu0 0.0
    %605 = vmatpush2.msra.mxu0 0.0
    %606 = vmatprep.subr.mxu0 0.0
    %607 = vmatpush2.msra.mxu0 0.0
    %608 = vmatprep.subr.mxu0 0.0
    %609 = vmatpush2.msra.mxu0 0.0
    %610 = vmatprep.subr.mxu0 0.0
    %611 = vmatpush2.msra.mxu0 0.0
    %612 = vmatprep.subr.mxu0 0.0
    %613 = vmatpush2.msra.mxu0 0.0
    %614 = vmatprep.subr.mxu0 0.0
    %615 = vmatpush2.msra.mxu0 0.0
    %616 = vmatprep.subr.mxu0 0.0
    %617 = vmatpush2.msra.mxu0 0.0
    %618 = vmatprep.subr.mxu0 0.0
    %619 = vmatpush2.msra.mxu0 0.0
    %620 = vmatprep.subr.mxu0 0.0
    %621 = vmatpush2.msra.mxu0 0.0
    %622 = vmatprep.subr.mxu0 0.0
    %623 = vmatpush2.msra.mxu0 0.0
    %624 = vmatprep.subr.mxu0 0.0
    %625 = vmatpush2.msra.mxu0 0.0
    %626 = vmatprep.subr.mxu0 0.0
    %627 = vmatpush2.msra.mxu0 0.0
    %628 = vmatprep.mubr.f32.mxu0 0.0
    %629 = vmatmul.mubr.f32.gmra.mxu0 %v547
    %v630 = vpop.f32.mrf.mxu0
    %v631 = vadd.f32 0.0, %v630
    %v632 = vpop.f32.mrf.mxu0
    %633 = vdwg.mxu0
    %v634 = vadd.f32 %v563, %v631
    %v635 = vtanh.pop %v634
    %v636 = vtanh.pop %v635
    %637 = vmatprep.subr.mxu0 %v225
    %638 = vmatpush1.msra.mxu0 %v224
    %639 = vmatprep.subr.mxu0 %v223
    %640 = vmatpush1.msra.mxu0 %v222
    %641 = vmatprep.subr.mxu0 %v221
    %642 = vmatpush1.msra.mxu0 %v220
    %643 = vmatprep.subr.mxu0 %v219
    %644 = vmatpush1.msra.mxu0 %v218
    %645 = vmatprep.subr.mxu0 %v217
    %646 = vmatpush1.msra.mxu0 %v216
    %647 = vmatprep.subr.mxu0 %v215
    %648 = vmatpush1.msra.mxu0 %v214
    %649 = vmatprep.subr.mxu0 %v213
    %650 = vmatpush1.msra.mxu0 %v212
    %651 = vmatprep.subr.mxu0 %v211
    %652 = vmatpush1.msra.mxu0 %v210
    %653 = vmatprep.subr.mxu0 %v209
    %654 = vmatpush1.msra.mxu0 %v208
    %655 = vmatprep.subr.mxu0 %v207
    %656 = vmatpush1.msra.mxu0 %v206
    %657 = vmatprep.subr.mxu0 %v205
    %658 = vmatpush1.msra.mxu0 %v204
    %659 = vmatprep.subr.mxu0 %v203
    %660 = vmatpush1.msra.mxu0 %v202
    %661 = vmatprep.subr.mxu0 %v201
    %662 = vmatpush1.msra.mxu0 %v200
    %663 = vmatprep.subr.mxu0 %v199
    %664 = vmatpush1.msra.mxu0 %v198
    %665 = vmatprep.subr.mxu0 %v197
    %666 = vmatpush1.msra.mxu0 %v196
    %667 = vmatprep.subr.mxu0 %v195
    %668 = vmatpush1.msra.mxu0 %v194
    %669 = vmatprep.subr.mxu0 0.0
    %670 = vmatpush2.msra.mxu0 0.0
    %671 = vmatprep.subr.mxu0 0.0
    %672 = vmatpush2.msra.mxu0 0.0
    %673 = vmatprep.subr.mxu0 0.0
    %674 = vmatpush2.msra.mxu0 0.0
    %675 = vmatprep.subr.mxu0 0.0
    %676 = vmatpush2.msra.mxu0 0.0
    %677 = vmatprep.subr.mxu0 0.0
    %678 = vmatpush2.msra.mxu0 0.0
    %679 = vmatprep.subr.mxu0 0.0
    %680 = vmatpush2.msra.mxu0 0.0
    %681 = vmatprep.subr.mxu0 0.0
    %682 = vmatpush2.msra.mxu0 0.0
    %683 = vmatprep.subr.mxu0 0.0
    %684 = vmatpush2.msra.mxu0 0.0
    %685 = vmatprep.subr.mxu0 0.0
    %686 = vmatpush2.msra.mxu0 0.0
    %687 = vmatprep.subr.mxu0 0.0
    %688 = vmatpush2.msra.mxu0 0.0
    %689 = vmatprep.subr.mxu0 0.0
    %690 = vmatpush2.msra.mxu0 0.0
    %691 = vmatprep.subr.mxu0 0.0
    %692 = vmatpush2.msra.mxu0 0.0
    %693 = vmatprep.subr.mxu0 0.0
    %694 = vmatpush2.msra.mxu0 0.0
    %695 = vmatprep.subr.mxu0 0.0
    %696 = vmatpush2.msra.mxu0 0.0
    %697 = vmatprep.subr.mxu0 0.0
    %698 = vmatpush2.msra.mxu0 0.0
    %699 = vmatprep.subr.mxu0 0.0
    %700 = vmatpush2.msra.mxu0 0.0
    %701 = vmatprep.mubr.f32.mxu0 0.0
    %702 = vmatmul.mubr.f32.gmra.mxu0 %v636
    %v703 = vpop.f32.mrf.mxu0
    %v704 = vadd.f32 %v311, %v703
    %v705 = vpop.f32.mrf.mxu0
    %v706 = vadd.f32 %v315, %v705
    %707 = vdwg.mxu0
    %v708 = vsel %vm229, %v704, -inf
    %v709 = vsel %vm390, %v708, -inf
    %710 = vmax.xlane.f32.xlu0 %v709
    %v711 = vpop.xlane.xlu0 %710
    %v712 = vsub.f32 %v708, %v711
    %v713 = vmul.f32 %v712, 1.442695
    %v714 = vpow.pop %v713
    %v715 = vsel %vm390, %v714, 0.0
    %716 = vadd.xlane.f32.xlu0 %v715
    %v717 = vpop.xlane.xlu0 %716
    %v718 = vrcp.pop %v717
    %v719 = vmul.f32 %v714, %v718
    %720 = vst [vmem:[#allocation11 + $0x2] sm:$0x1] %v719
    %721 = vst [vmem:[#allocation12 + $0x2] sm:$0x1] %v706
    %v722 = vld [vmem:[#allocation2 + $0x3] sm:$0x1]
    %723 = vmatprep.subr.mxu0 0.0
    %724 = vmatpush1.msra.mxu0 %v193
    %725 = vmatprep.subr.mxu0 0.0
    %726 = vmatpush1.msra.mxu0 %v192
    %727 = vmatprep.subr.mxu0 0.0
    %728 = vmatpush1.msra.mxu0 %v191
    %729 = vmatprep.subr.mxu0 0.0
    %730 = vmatpush1.msra.mxu0 %v190
    %731 = vmatprep.subr.mxu0 0.0
    %732 = vmatpush1.msra.mxu0 %v189
    %733 = vmatprep.subr.mxu0 0.0
    %734 = vmatpush1.msra.mxu0 %v188
    %735 = vmatprep.subr.mxu0 0.0
    %736 = vmatpush1.msra.mxu0 %v187
    %737 = vmatprep.subr.mxu0 0.0
    %738 = vmatpush1.msra.mxu0 %v186
    %739 = vmatprep.subr.mxu0 0.0
    %740 = vmatpush1.msra.mxu0 %v185
    %741 = vmatprep.subr.mxu0 0.0
    %742 = vmatpush1.msra.mxu0 %v184
    %743 = vmatprep.subr.mxu0 0.0
    %744 = vmatpush1.msra.mxu0 %v183
    %745 = vmatprep.subr.mxu0 0.0
    %746 = vmatpush1.msra.mxu0 %v182
    %747 = vmatprep.subr.mxu0 0.0
    %748 = vmatpush1.msra.mxu0 %v181
    %749 = vmatprep.subr.mxu0 0.0
    %750 = vmatpush1.msra.mxu0 %v180
    %751 = vmatprep.subr.mxu0 0.0
    %752 = vmatpush1.msra.mxu0 %v179
    %753 = vmatprep.subr.mxu0 0.0
    %754 = vmatpush1.msra.mxu0 %v178
    %755 = vmatprep.subr.mxu0 0.0
    %756 = vmatpush2.msra.mxu0 0.0
    %757 = vmatprep.subr.mxu0 0.0
    %758 = vmatpush2.msra.mxu0 0.0
    %759 = vmatprep.subr.mxu0 0.0
    %760 = vmatpush2.msra.mxu0 0.0
    %761 = vmatprep.subr.mxu0 0.0
    %762 = vmatpush2.msra.mxu0 0.0
    %763 = vmatprep.subr.mxu0 0.0
    %764 = vmatpush2.msra.mxu0 0.0
    %765 = vmatprep.subr.mxu0 0.0
    %766 = vmatpush2.msra.mxu0 0.0
    %767 = vmatprep.subr.mxu0 0.0
    %768 = vmatpush2.msra.mxu0 0.0
    %769 = vmatprep.subr.mxu0 0.0
    %770 = vmatpush2.msra.mxu0 0.0
    %771 = vmatprep.subr.mxu0 0.0
    %772 = vmatpush2.msra.mxu0 0.0
    %773 = vmatprep.subr.mxu0 0.0
    %774 = vmatpush2.msra.mxu0 0.0
    %775 = vmatprep.subr.mxu0 0.0
    %776 = vmatpush2.msra.mxu0 0.0
    %777 = vmatprep.subr.mxu0 0.0
    %778 = vmatpush2.msra.mxu0 0.0
    %779 = vmatprep.subr.mxu0 0.0
    %780 = vmatpush2.msra.mxu0 0.0
    %781 = vmatprep.subr.mxu0 0.0
    %782 = vmatpush2.msra.mxu0 0.0
    %783 = vmatprep.subr.mxu0 0.0
    %784 = vmatpush2.msra.mxu0 0.0
    %785 = vmatprep.subr.mxu0 0.0
    %786 = vmatpush2.msra.mxu0 0.0
    %787 = vmatprep.mubr.f32.mxu0 0.0
    %788 = vmatmul.mubr.f32.gmra.mxu0 %v706
    %v789 = vpop.f32.mrf.mxu0
    %v790 = vadd.f32 0.0, %v789
    %v791 = vpop.f32.mrf.mxu0
    %792 = vdwg.mxu0
    %v793 = vadd.f32 %v722, %v790
    %v794 = vtanh.pop %v793
    %v795 = vtanh.pop %v794
    %796 = vmatprep.subr.mxu0 %v225
    %797 = vmatpush1.msra.mxu0 %v224
    %798 = vmatprep.subr.mxu0 %v223
    %799 = vmatpush1.msra.mxu0 %v222
    %800 = vmatprep.subr.mxu0 %v221
    %801 = vmatpush1.msra.mxu0 %v220
    %802 = vmatprep.subr.mxu0 %v219
    %803 = vmatpush1.msra.mxu0 %v218
    %804 = vmatprep.subr.mxu0 %v217
    %805 = vmatpush1.msra.mxu0 %v216
    %806 = vmatprep.subr.mxu0 %v215
    %807 = vmatpush1.msra.mxu0 %v214
    %808 = vmatprep.subr.mxu0 %v213
    %809 = vmatpush1.msra.mxu0 %v212
    %810 = vmatprep.subr.mxu0 %v211
    %811 = vmatpush1.msra.mxu0 %v210
    %812 = vmatprep.subr.mxu0 %v209
    %813 = vmatpush1.msra.mxu0 %v208
    %814 = vmatprep.subr.mxu0 %v207
    %815 = vmatpush1.msra.mxu0 %v206
    %816 = vmatprep.subr.mxu0 %v205
    %817 = vmatpush1.msra.mxu0 %v204
    %818 = vmatprep.subr.mxu0 %v203
    %819 = vmatpush1.msra.mxu0 %v202
    %820 = vmatprep.subr.mxu0 %v201
    %821 = vmatpush1.msra.mxu0 %v200
    %822 = vmatprep.subr.mxu0 %v199
    %823 = vmatpush1.msra.mxu0 %v198
    %824 = vmatprep.subr.mxu0 %v197
    %825 = vmatpush1.msra.mxu0 %v196
    %826 = vmatprep.subr.mxu0 %v195
    %827 = vmatpush1.msra.mxu0 %v194
    %828 = vmatprep.subr.mxu0 0.0
    %829 = vmatpush2.msra.mxu0 0.0
    %830 = vmatprep.subr.mxu0 0.0
    %831 = vmatpush2.msra.mxu0 0.0
    %832 = vmatprep.subr.mxu0 0.0
    %833 = vmatpush2.msra.mxu0 0.0
    %834 = vmatprep.subr.mxu0 0.0
    %835 = vmatpush2.msra.mxu0 0.0
    %836 = vmatprep.subr.mxu0 0.0
    %837 = vmatpush2.msra.mxu0 0.0
    %838 = vmatprep.subr.mxu0 0.0
    %839 = vmatpush2.msra.mxu0 0.0
    %840 = vmatprep.subr.mxu0 0.0
    %841 = vmatpush2.msra.mxu0 0.0
    %842 = vmatprep.subr.mxu0 0.0
    %843 = vmatpush2.msra.mxu0 0.0
    %844 = vmatprep.subr.mxu0 0.0
    %845 = vmatpush2.msra.mxu0 0.0
    %846 = vmatprep.subr.mxu0 0.0
    %847 = vmatpush2.msra.mxu0 0.0
    %848 = vmatprep.subr.mxu0 0.0
    %849 = vmatpush2.msra.mxu0 0.0
    %850 = vmatprep.subr.mxu0 0.0
    %851 = vmatpush2.msra.mxu0 0.0
    %852 = vmatprep.subr.mxu0 0.0
    %853 = vmatpush2.msra.mxu0 0.0
    %854 = vmatprep.subr.mxu0 0.0
    %855 = vmatpush2.msra.mxu0 0.0
    %856 = vmatprep.subr.mxu0 0.0
    %857 = vmatpush2.msra.mxu0 0.0
    %858 = vmatprep.subr.mxu0 0.0
    %859 = vmatpush2.msra.mxu0 0.0
    %860 = vmatprep.mubr.f32.mxu0 0.0
    %861 = vmatmul.mubr.f32.gmra.mxu0 %v795
    %v862 = vpop.f32.mrf.mxu0
    %v863 = vadd.f32 %v311, %v862
    %v864 = vpop.f32.mrf.mxu0
    %v865 = vadd.f32 %v315, %v864
    %866 = vdwg.mxu0
    %v867 = vsel %vm229, %v863, -inf
    %v868 = vsel %vm390, %v867, -inf
    %869 = vmax.xlane.f32.xlu0 %v868
    %v870 = vpop.xlane.xlu0 %869
    %v871 = vsub.f32 %v867, %v870
    %v872 = vmul.f32 %v871, 1.442695
    %v873 = vpow.pop %v872
    %v874 = vsel %vm390, %v873, 0.0
    %875 = vadd.xlane.f32.xlu0 %v874
    %v876 = vpop.xlane.xlu0 %875
    %v877 = vrcp.pop %v876
    %v878 = vmul.f32 %v873, %v877
    %879 = vst [vmem:[#allocation11 + $0x3] sm:$0x1] %v878
    %880 = vst [vmem:[#allocation12 + $0x3] sm:$0x1] %v865
    %v881 = vld [vmem:[#allocation2 + $0x4] sm:$0x1]
    %882 = vmatprep.subr.mxu0 0.0
    %883 = vmatpush1.msra.mxu0 %v193
    %884 = vmatprep.subr.mxu0 0.0
    %885 = vmatpush1.msra.mxu0 %v192
    %886 = vmatprep.subr.mxu0 0.0
    %887 = vmatpush1.msra.mxu0 %v191
    %888 = vmatprep.subr.mxu0 0.0
    %889 = vmatpush1.msra.mxu0 %v190
    %890 = vmatprep.subr.mxu0 0.0
    %891 = vmatpush1.msra.mxu0 %v189
    %892 = vmatprep.subr.mxu0 0.0
    %893 = vmatpush1.msra.mxu0 %v188
    %894 = vmatprep.subr.mxu0 0.0
    %895 = vmatpush1.msra.mxu0 %v187
    %896 = vmatprep.subr.mxu0 0.0
    %897 = vmatpush1.msra.mxu0 %v186
    %898 = vmatprep.subr.mxu0 0.0
    %899 = vmatpush1.msra.mxu0 %v185
    %900 = vmatprep.subr.mxu0 0.0
    %901 = vmatpush1.msra.mxu0 %v184
    %902 = vmatprep.subr.mxu0 0.0
    %903 = vmatpush1.msra.mxu0 %v183
    %904 = vmatprep.subr.mxu0 0.0
    %905 = vmatpush1.msra.mxu0 %v182
    %906 = vmatprep.subr.mxu0 0.0
    %907 = vmatpush1.msra.mxu0 %v181
    %908 = vmatprep.subr.mxu0 0.0
    %909 = vmatpush1.msra.mxu0 %v180
    %910 = vmatprep.subr.mxu0 0.0
    %911 = vmatpush1.msra.mxu0 %v179
    %912 = vmatprep.subr.mxu0 0.0
    %913 = vmatpush1.msra.mxu0 %v178
    %914 = vmatprep.subr.mxu0 0.0
    %915 = vmatpush2.msra.mxu0 0.0
    %916 = vmatprep.subr.mxu0 0.0
    %917 = vmatpush2.msra.mxu0 0.0
    %918 = vmatprep.subr.mxu0 0.0
    %919 = vmatpush2.msra.mxu0 0.0
    %920 = vmatprep.subr.mxu0 0.0
    %921 = vmatpush2.msra.mxu0 0.0
    %922 = vmatprep.subr.mxu0 0.0
    %923 = vmatpush2.msra.mxu0 0.0
    %924 = vmatprep.subr.mxu0 0.0
    %925 = vmatpush2.msra.mxu0 0.0
    %926 = vmatprep.subr.mxu0 0.0
    %927 = vmatpush2.msra.mxu0 0.0
    %928 = vmatprep.subr.mxu0 0.0
    %929 = vmatpush2.msra.mxu0 0.0
    %930 = vmatprep.subr.mxu0 0.0
    %931 = vmatpush2.msra.mxu0 0.0
    %932 = vmatprep.subr.mxu0 0.0
    %933 = vmatpush2.msra.mxu0 0.0
    %934 = vmatprep.subr.mxu0 0.0
    %935 = vmatpush2.msra.mxu0 0.0
    %936 = vmatprep.subr.mxu0 0.0
    %937 = vmatpush2.msra.mxu0 0.0
    %938 = vmatprep.subr.mxu0 0.0
    %939 = vmatpush2.msra.mxu0 0.0
    %940 = vmatprep.subr.mxu0 0.0
    %941 = vmatpush2.msra.mxu0 0.0
    %942 = vmatprep.subr.mxu0 0.0
    %943 = vmatpush2.msra.mxu0 0.0
    %944 = vmatprep.subr.mxu0 0.0
    %945 = vmatpush2.msra.mxu0 0.0
    %946 = vmatprep.mubr.f32.mxu0 0.0
    %947 = vmatmul.mubr.f32.gmra.mxu0 %v865
    %v948 = vpop.f32.mrf.mxu0
    %v949 = vadd.f32 0.0, %v948
    %v950 = vpop.f32.mrf.mxu0
    %951 = vdwg.mxu0
    %v952 = vadd.f32 %v881, %v949
    %v953 = vtanh.pop %v952
    %v954 = vtanh.pop %v953
    %955 = vmatprep.subr.mxu0 %v225
    %956 = vmatpush1.msra.mxu0 %v224
    %957 = vmatprep.subr.mxu0 %v223
    %958 = vmatpush1.msra.mxu0 %v222
    %959 = vmatprep.subr.mxu0 %v221
    %960 = vmatpush1.msra.mxu0 %v220
    %961 = vmatprep.subr.mxu0 %v219
    %962 = vmatpush1.msra.mxu0 %v218
    %963 = vmatprep.subr.mxu0 %v217
    %964 = vmatpush1.msra.mxu0 %v216
    %965 = vmatprep.subr.mxu0 %v215
    %966 = vmatpush1.msra.mxu0 %v214
    %967 = vmatprep.subr.mxu0 %v213
    %968 = vmatpush1.msra.mxu0 %v212
    %969 = vmatprep.subr.mxu0 %v211
    %970 = vmatpush1.msra.mxu0 %v210
    %971 = vmatprep.subr.mxu0 %v209
    %972 = vmatpush1.msra.mxu0 %v208
    %973 = vmatprep.subr.mxu0 %v207
    %974 = vmatpush1.msra.mxu0 %v206
    %975 = vmatprep.subr.mxu0 %v205
    %976 = vmatpush1.msra.mxu0 %v204
    %977 = vmatprep.subr.mxu0 %v203
    %978 = vmatpush1.msra.mxu0 %v202
    %979 = vmatprep.subr.mxu0 %v201
    %980 = vmatpush1.msra.mxu0 %v200
    %981 = vmatprep.subr.mxu0 %v199
    %982 = vmatpush1.msra.mxu0 %v198
    %983 = vmatprep.subr.mxu0 %v197
    %984 = vmatpush1.msra.mxu0 %v196
    %985 = vmatprep.subr.mxu0 %v195
    %986 = vmatpush1.msra.mxu0 %v194
    %987 = vmatprep.subr.mxu0 0.0
    %988 = vmatpush2.msra.mxu0 0.0
    %989 = vmatprep.subr.mxu0 0.0
    %990 = vmatpush2.msra.mxu0 0.0
    %991 = vmatprep.subr.mxu0 0.0
    %992 = vmatpush2.msra.mxu0 0.0
    %993 = vmatprep.subr.mxu0 0.0
    %994 = vmatpush2.msra.mxu0 0.0
    %995 = vmatprep.subr.mxu0 0.0
    %996 = vmatpush2.msra.mxu0 0.0
    %997 = vmatprep.subr.mxu0 0.0
    %998 = vmatpush2.msra.mxu0 0.0
    %999 = vmatprep.subr.mxu0 0.0
    %1000 = vmatpush2.msra.mxu0 0.0
    %1001 = vmatprep.subr.mxu0 0.0
    %1002 = vmatpush2.msra.mxu0 0.0
    %1003 = vmatprep.subr.mxu0 0.0
    %1004 = vmatpush2.msra.mxu0 0.0
    %1005 = vmatprep.subr.mxu0 0.0
    %1006 = vmatpush2.msra.mxu0 0.0
    %1007 = vmatprep.subr.mxu0 0.0
    %1008 = vmatpush2.msra.mxu0 0.0
    %1009 = vmatprep.subr.mxu0 0.0
    %1010 = vmatpush2.msra.mxu0 0.0
    %1011 = vmatprep.subr.mxu0 0.0
    %1012 = vmatpush2.msra.mxu0 0.0
    %1013 = vmatprep.subr.mxu0 0.0
    %1014 = vmatpush2.msra.mxu0 0.0
    %1015 = vmatprep.subr.mxu0 0.0
    %1016 = vmatpush2.msra.mxu0 0.0
    %1017 = vmatprep.subr.mxu0 0.0
    %1018 = vmatpush2.msra.mxu0 0.0
    %1019 = vmatprep.mubr.f32.mxu0 0.0
    %1020 = vmatmul.mubr.f32.gmra.mxu0 %v954
    %v1021 = vpop.f32.mrf.mxu0
    %v1022 = vadd.f32 %v311, %v1021
    %v1023 = vpop.f32.mrf.mxu0
    %v1024 = vadd.f32 %v315, %v1023
    %1025 = vdwg.mxu0
    %v1026 = vsel %vm229, %v1022, -inf
    %v1027 = vsel %vm390, %v1026, -inf
    %1028 = vmax.xlane.f32.xlu0 %v1027
    %v1029 = vpop.xlane.xlu0 %1028
    %v1030 = vsub.f32 %v1026, %v1029
    %v1031 = vmul.f32 %v1030, 1.442695
    %v1032 = vpow.pop %v1031
    %v1033 = vsel %vm390, %v1032, 0.0
    %1034 = vadd.xlane.f32.xlu0 %v1033
    %v1035 = vpop.xlane.xlu0 %1034
    %v1036 = vrcp.pop %v1035
    %v1037 = vmul.f32 %v1032, %v1036
    %1038 = vst [vmem:[#allocation11 + $0x4] sm:$0x1] %v1037
    %1039 = vst [vmem:[#allocation12 + $0x4] sm:$0x1] %v1024
    %v1040 = vld [vmem:[#allocation2 + $0x5] sm:$0x1]
    %1041 = vmatprep.subr.mxu0 0.0
    %1042 = vmatpush1.msra.mxu0 %v193
    %1043 = vmatprep.subr.mxu0 0.0
    %1044 = vmatpush1.msra.mxu0 %v192
    %1045 = vmatprep.subr.mxu0 0.0
    %1046 = vmatpush1.msra.mxu0 %v191
    %1047 = vmatprep.subr.mxu0 0.0
    %1048 = vmatpush1.msra.mxu0 %v190
    %1049 = vmatprep.subr.mxu0 0.0
    %1050 = vmatpush1.msra.mxu0 %v189
    %1051 = vmatprep.subr.mxu0 0.0
    %1052 = vmatpush1.msra.mxu0 %v188
    %1053 = vmatprep.subr.mxu0 0.0
    %1054 = vmatpush1.msra.mxu0 %v187
    %1055 = vmatprep.subr.mxu0 0.0
    %1056 = vmatpush1.msra.mxu0 %v186
    %1057 = vmatprep.subr.mxu0 0.0
    %1058 = vmatpush1.msra.mxu0 %v185
    %1059 = vmatprep.subr.mxu0 0.0
    %1060 = vmatpush1.msra.mxu0 %v184
    %1061 = vmatprep.subr.mxu0 0.0
    %1062 = vmatpush1.msra.mxu0 %v183
    %1063 = vmatprep.subr.mxu0 0.0
    %1064 = vmatpush1.msra.mxu0 %v182
    %1065 = vmatprep.subr.mxu0 0.0
    %1066 = vmatpush1.msra.mxu0 %v181
    %1067 = vmatprep.subr.mxu0 0.0
    %1068 = vmatpush1.msra.mxu0 %v180
    %1069 = vmatprep.subr.mxu0 0.0
    %1070 = vmatpush1.msra.mxu0 %v179
    %1071 = vmatprep.subr.mxu0 0.0
    %1072 = vmatpush1.msra.mxu0 %v178
    %1073 = vmatprep.subr.mxu0 0.0
    %1074 = vmatpush2.msra.mxu0 0.0
    %1075 = vmatprep.subr.mxu0 0.0
    %1076 = vmatpush2.msra.mxu0 0.0
    %1077 = vmatprep.subr.mxu0 0.0
    %1078 = vmatpush2.msra.mxu0 0.0
    %1079 = vmatprep.subr.mxu0 0.0
    %1080 = vmatpush2.msra.mxu0 0.0
    %1081 = vmatprep.subr.mxu0 0.0
    %1082 = vmatpush2.msra.mxu0 0.0
    %1083 = vmatprep.subr.mxu0 0.0
    %1084 = vmatpush2.msra.mxu0 0.0
    %1085 = vmatprep.subr.mxu0 0.0
    %1086 = vmatpush2.msra.mxu0 0.0
    %1087 = vmatprep.subr.mxu0 0.0
    %1088 = vmatpush2.msra.mxu0 0.0
    %1089 = vmatprep.subr.mxu0 0.0
    %1090 = vmatpush2.msra.mxu0 0.0
    %1091 = vmatprep.subr.mxu0 0.0
    %1092 = vmatpush2.msra.mxu0 0.0
    %1093 = vmatprep.subr.mxu0 0.0
    %1094 = vmatpush2.msra.mxu0 0.0
    %1095 = vmatprep.subr.mxu0 0.0
    %1096 = vmatpush2.msra.mxu0 0.0
    %1097 = vmatprep.subr.mxu0 0.0
    %1098 = vmatpush2.msra.mxu0 0.0
    %1099 = vmatprep.subr.mxu0 0.0
    %1100 = vmatpush2.msra.mxu0 0.0
    %1101 = vmatprep.subr.mxu0 0.0
    %1102 = vmatpush2.msra.mxu0 0.0
    %1103 = vmatprep.subr.mxu0 0.0
    %1104 = vmatpush2.msra.mxu0 0.0
    %1105 = vmatprep.mubr.f32.mxu0 0.0
    %1106 = vmatmul.mubr.f32.gmra.mxu0 %v1024
    %v1107 = vpop.f32.mrf.mxu0
    %v1108 = vadd.f32 0.0, %v1107
    %v1109 = vpop.f32.mrf.mxu0
    %1110 = vdwg.mxu0
    %v1111 = vadd.f32 %v1040, %v1108
    %v1112 = vtanh.pop %v1111
    %v1113 = vtanh.pop %v1112
    %1114 = vmatprep.subr.mxu0 %v225
    %1115 = vmatpush1.msra.mxu0 %v224
    %1116 = vmatprep.subr.mxu0 %v223
    %1117 = vmatpush1.msra.mxu0 %v222
    %1118 = vmatprep.subr.mxu0 %v221
    %1119 = vmatpush1.msra.mxu0 %v220
    %1120 = vmatprep.subr.mxu0 %v219
    %1121 = vmatpush1.msra.mxu0 %v218
    %1122 = vmatprep.subr.mxu0 %v217
    %1123 = vmatpush1.msra.mxu0 %v216
    %1124 = vmatprep.subr.mxu0 %v215
    %1125 = vmatpush1.msra.mxu0 %v214
    %1126 = vmatprep.subr.mxu0 %v213
    %1127 = vmatpush1.msra.mxu0 %v212
    %1128 = vmatprep.subr.mxu0 %v211
    %1129 = vmatpush1.msra.mxu0 %v210
    %1130 = vmatprep.subr.mxu0 %v209
    %1131 = vmatpush1.msra.mxu0 %v208
    %1132 = vmatprep.subr.mxu0 %v207
    %1133 = vmatpush1.msra.mxu0 %v206
    %1134 = vmatprep.subr.mxu0 %v205
    %1135 = vmatpush1.msra.mxu0 %v204
    %1136 = vmatprep.subr.mxu0 %v203
    %1137 = vmatpush1.msra.mxu0 %v202
    %1138 = vmatprep.subr.mxu0 %v201
    %1139 = vmatpush1.msra.mxu0 %v200
    %1140 = vmatprep.subr.mxu0 %v199
    %1141 = vmatpush1.msra.mxu0 %v198
    %1142 = vmatprep.subr.mxu0 %v197
    %1143 = vmatpush1.msra.mxu0 %v196
    %1144 = vmatprep.subr.mxu0 %v195
    %1145 = vmatpush1.msra.mxu0 %v194
    %1146 = vmatprep.subr.mxu0 0.0
    %1147 = vmatpush2.msra.mxu0 0.0
    %1148 = vmatprep.subr.mxu0 0.0
    %1149 = vmatpush2.msra.mxu0 0.0
    %1150 = vmatprep.subr.mxu0 0.0
    %1151 = vmatpush2.msra.mxu0 0.0
    %1152 = vmatprep.subr.mxu0 0.0
    %1153 = vmatpush2.msra.mxu0 0.0
    %1154 = vmatprep.subr.mxu0 0.0
    %1155 = vmatpush2.msra.mxu0 0.0
    %1156 = vmatprep.subr.mxu0 0.0
    %1157 = vmatpush2.msra.mxu0 0.0
    %1158 = vmatprep.subr.mxu0 0.0
    %1159 = vmatpush2.msra.mxu0 0.0
    %1160 = vmatprep.subr.mxu0 0.0
    %1161 = vmatpush2.msra.mxu0 0.0
    %1162 = vmatprep.subr.mxu0 0.0
    %1163 = vmatpush2.msra.mxu0 0.0
    %1164 = vmatprep.subr.mxu0 0.0
    %1165 = vmatpush2.msra.mxu0 0.0
    %1166 = vmatprep.subr.mxu0 0.0
    %1167 = vmatpush2.msra.mxu0 0.0
    %1168 = vmatprep.subr.mxu0 0.0
    %1169 = vmatpush2.msra.mxu0 0.0
    %1170 = vmatprep.subr.mxu0 0.0
    %1171 = vmatpush2.msra.mxu0 0.0
    %1172 = vmatprep.subr.mxu0 0.0
    %1173 = vmatpush2.msra.mxu0 0.0
    %1174 = vmatprep.subr.mxu0 0.0
    %1175 = vmatpush2.msra.mxu0 0.0
    %1176 = vmatprep.subr.mxu0 0.0
    %1177 = vmatpush2.msra.mxu0 0.0
    %1178 = vmatprep.mubr.f32.mxu0 0.0
    %1179 = vmatmul.mubr.f32.gmra.mxu0 %v1113
    %v1180 = vpop.f32.mrf.mxu0
    %v1181 = vadd.f32 %v311, %v1180
    %v1182 = vpop.f32.mrf.mxu0
    %v1183 = vadd.f32 %v315, %v1182
    %1184 = vdwg.mxu0
    %v1185 = vsel %vm229, %v1181, -inf
    %v1186 = vsel %vm390, %v1185, -inf
    %1187 = vmax.xlane.f32.xlu0 %v1186
    %v1188 = vpop.xlane.xlu0 %1187
    %v1189 = vsub.f32 %v1185, %v1188
    %v1190 = vmul.f32 %v1189, 1.442695
    %v1191 = vpow.pop %v1190
    %v1192 = vsel %vm390, %v1191, 0.0
    %1193 = vadd.xlane.f32.xlu0 %v1192
    %v1194 = vpop.xlane.xlu0 %1193
    %v1195 = vrcp.pop %v1194
    %v1196 = vmul.f32 %v1191, %v1195
    %1197 = vst [vmem:[#allocation11 + $0x5] sm:$0x1] %v1196
    %1198 = vst [vmem:[#allocation12 + $0x5] sm:$0x1] %v1183
    %v1199 = vld [vmem:[#allocation2 + $0x6] sm:$0x1]
    %1200 = vmatprep.subr.mxu0 0.0
    %1201 = vmatpush1.msra.mxu0 %v193
    %1202 = vmatprep.subr.mxu0 0.0
    %1203 = vmatpush1.msra.mxu0 %v192
    %1204 = vmatprep.subr.mxu0 0.0
    %1205 = vmatpush1.msra.mxu0 %v191
    %1206 = vmatprep.subr.mxu0 0.0
    %1207 = vmatpush1.msra.mxu0 %v190
    %1208 = vmatprep.subr.mxu0 0.0
    %1209 = vmatpush1.msra.mxu0 %v189
    %1210 = vmatprep.subr.mxu0 0.0
    %1211 = vmatpush1.msra.mxu0 %v188
    %1212 = vmatprep.subr.mxu0 0.0
    %1213 = vmatpush1.msra.mxu0 %v187
    %1214 = vmatprep.subr.mxu0 0.0
    %1215 = vmatpush1.msra.mxu0 %v186
    %1216 = vmatprep.subr.mxu0 0.0
    %1217 = vmatpush1.msra.mxu0 %v185
    %1218 = vmatprep.subr.mxu0 0.0
    %1219 = vmatpush1.msra.mxu0 %v184
    %1220 = vmatprep.subr.mxu0 0.0
    %1221 = vmatpush1.msra.mxu0 %v183
    %1222 = vmatprep.subr.mxu0 0.0
    %1223 = vmatpush1.msra.mxu0 %v182
    %1224 = vmatprep.subr.mxu0 0.0
    %1225 = vmatpush1.msra.mxu0 %v181
    %1226 = vmatprep.subr.mxu0 0.0
    %1227 = vmatpush1.msra.mxu0 %v180
    %1228 = vmatprep.subr.mxu0 0.0
    %1229 = vmatpush1.msra.mxu0 %v179
    %1230 = vmatprep.subr.mxu0 0.0
    %1231 = vmatpush1.msra.mxu0 %v178
    %1232 = vmatprep.subr.mxu0 0.0
    %1233 = vmatpush2.msra.mxu0 0.0
    %1234 = vmatprep.subr.mxu0 0.0
    %1235 = vmatpush2.msra.mxu0 0.0
    %1236 = vmatprep.subr.mxu0 0.0
    %1237 = vmatpush2.msra.mxu0 0.0
    %1238 = vmatprep.subr.mxu0 0.0
    %1239 = vmatpush2.msra.mxu0 0.0
    %1240 = vmatprep.subr.mxu0 0.0
    %1241 = vmatpush2.msra.mxu0 0.0
    %1242 = vmatprep.subr.mxu0 0.0
    %1243 = vmatpush2.msra.mxu0 0.0
    %1244 = vmatprep.subr.mxu0 0.0
    %1245 = vmatpush2.msra.mxu0 0.0
    %1246 = vmatprep.subr.mxu0 0.0
    %1247 = vmatpush2.msra.mxu0 0.0
    %1248 = vmatprep.subr.mxu0 0.0
    %1249 = vmatpush2.msra.mxu0 0.0
    %1250 = vmatprep.subr.mxu0 0.0
    %1251 = vmatpush2.msra.mxu0 0.0
    %1252 = vmatprep.subr.mxu0 0.0
    %1253 = vmatpush2.msra.mxu0 0.0
    %1254 = vmatprep.subr.mxu0 0.0
    %1255 = vmatpush2.msra.mxu0 0.0
    %1256 = vmatprep.subr.mxu0 0.0
    %1257 = vmatpush2.msra.mxu0 0.0
    %1258 = vmatprep.subr.mxu0 0.0
    %1259 = vmatpush2.msra.mxu0 0.0
    %1260 = vmatprep.subr.mxu0 0.0
    %1261 = vmatpush2.msra.mxu0 0.0
    %1262 = vmatprep.subr.mxu0 0.0
    %1263 = vmatpush2.msra.mxu0 0.0
    %1264 = vmatprep.mubr.f32.mxu0 0.0
    %1265 = vmatmul.mubr.f32.gmra.mxu0 %v1183
    %v1266 = vpop.f32.mrf.mxu0
    %v1267 = vadd.f32 0.0, %v1266
    %v1268 = vpop.f32.mrf.mxu0
    %1269 = vdwg.mxu0
    %v1270 = vadd.f32 %v1199, %v1267
    %v1271 = vtanh.pop %v1270
    %v1272 = vtanh.pop %v1271
    %1273 = vmatprep.subr.mxu0 %v225
    %1274 = vmatpush1.msra.mxu0 %v224
    %1275 = vmatprep.subr.mxu0 %v223
    %1276 = vmatpush1.msra.mxu0 %v222
    %1277 = vmatprep.subr.mxu0 %v221
    %1278 = vmatpush1.msra.mxu0 %v220
    %1279 = vmatprep.subr.mxu0 %v219
    %1280 = vmatpush1.msra.mxu0 %v218
    %1281 = vmatprep.subr.mxu0 %v217
    %1282 = vmatpush1.msra.mxu0 %v216
    %1283 = vmatprep.subr.mxu0 %v215
    %1284 = vmatpush1.msra.mxu0 %v214
    %1285 = vmatprep.subr.mxu0 %v213
    %1286 = vmatpush1.msra.mxu0 %v212
    %1287 = vmatprep.subr.mxu0 %v211
    %1288 = vmatpush1.msra.mxu0 %v210
    %1289 = vmatprep.subr.mxu0 %v209
    %1290 = vmatpush1.msra.mxu0 %v208
    %1291 = vmatprep.subr.mxu0 %v207
    %1292 = vmatpush1.msra.mxu0 %v206
    %1293 = vmatprep.subr.mxu0 %v205
    %1294 = vmatpush1.msra.mxu0 %v204
    %1295 = vmatprep.subr.mxu0 %v203
    %1296 = vmatpush1.msra.mxu0 %v202
    %1297 = vmatprep.subr.mxu0 %v201
    %1298 = vmatpush1.msra.mxu0 %v200
    %1299 = vmatprep.subr.mxu0 %v199
    %1300 = vmatpush1.msra.mxu0 %v198
    %1301 = vmatprep.subr.mxu0 %v197
    %1302 = vmatpush1.msra.mxu0 %v196
    %1303 = vmatprep.subr.mxu0 %v195
    %1304 = vmatpush1.msra.mxu0 %v194
    %1305 = vmatprep.subr.mxu0 0.0
    %1306 = vmatpush2.msra.mxu0 0.0
    %1307 = vmatprep.subr.mxu0 0.0
    %1308 = vmatpush2.msra.mxu0 0.0
    %1309 = vmatprep.subr.mxu0 0.0
    %1310 = vmatpush2.msra.mxu0 0.0
    %1311 = vmatprep.subr.mxu0 0.0
    %1312 = vmatpush2.msra.mxu0 0.0
    %1313 = vmatprep.subr.mxu0 0.0
    %1314 = vmatpush2.msra.mxu0 0.0
    %1315 = vmatprep.subr.mxu0 0.0
    %1316 = vmatpush2.msra.mxu0 0.0
    %1317 = vmatprep.subr.mxu0 0.0
    %1318 = vmatpush2.msra.mxu0 0.0
    %1319 = vmatprep.subr.mxu0 0.0
    %1320 = vmatpush2.msra.mxu0 0.0
    %1321 = vmatprep.subr.mxu0 0.0
    %1322 = vmatpush2.msra.mxu0 0.0
    %1323 = vmatprep.subr.mxu0 0.0
    %1324 = vmatpush2.msra.mxu0 0.0
    %1325 = vmatprep.subr.mxu0 0.0
    %1326 = vmatpush2.msra.mxu0 0.0
    %1327 = vmatprep.subr.mxu0 0.0
    %1328 = vmatpush2.msra.mxu0 0.0
    %1329 = vmatprep.subr.mxu0 0.0
    %1330 = vmatpush2.msra.mxu0 0.0
    %1331 = vmatprep.subr.mxu0 0.0
    %1332 = vmatpush2.msra.mxu0 0.0
    %1333 = vmatprep.subr.mxu0 0.0
    %1334 = vmatpush2.msra.mxu0 0.0
    %1335 = vmatprep.subr.mxu0 0.0
    %1336 = vmatpush2.msra.mxu0 0.0
    %1337 = vmatprep.mubr.f32.mxu0 0.0
    %1338 = vmatmul.mubr.f32.gmra.mxu0 %v1272
    %v1339 = vpop.f32.mrf.mxu0
    %v1340 = vadd.f32 %v311, %v1339
    %v1341 = vpop.f32.mrf.mxu0
    %v1342 = vadd.f32 %v315, %v1341
    %1343 = vdwg.mxu0
    %v1344 = vsel %vm229, %v1340, -inf
    %v1345 = vsel %vm390, %v1344, -inf
    %1346 = vmax.xlane.f32.xlu0 %v1345
    %v1347 = vpop.xlane.xlu0 %1346
    %v1348 = vsub.f32 %v1344, %v1347
    %v1349 = vmul.f32 %v1348, 1.442695
    %v1350 = vpow.pop %v1349
    %v1351 = vsel %vm390, %v1350, 0.0
    %1352 = vadd.xlane.f32.xlu0 %v1351
    %v1353 = vpop.xlane.xlu0 %1352
    %v1354 = vrcp.pop %v1353
    %v1355 = vmul.f32 %v1350, %v1354
    %1356 = vst [vmem:[#allocation11 + $0x6] sm:$0x1] %v1355
    %1357 = vst [vmem:[#allocation12 + $0x6] sm:$0x1] %v1342
    %v1358 = vld [vmem:[#allocation2 + $0x7] sm:$0x1]
    %1359 = vmatprep.subr.mxu0 0.0
    %1360 = vmatpush1.msra.mxu0 %v193
    %1361 = vmatprep.subr.mxu0 0.0
    %1362 = vmatpush1.msra.mxu0 %v192
    %1363 = vmatprep.subr.mxu0 0.0
    %1364 = vmatpush1.msra.mxu0 %v191
    %1365 = vmatprep.subr.mxu0 0.0
    %1366 = vmatpush1.msra.mxu0 %v190
    %1367 = vmatprep.subr.mxu0 0.0
    %1368 = vmatpush1.msra.mxu0 %v189
    %1369 = vmatprep.subr.mxu0 0.0
    %1370 = vmatpush1.msra.mxu0 %v188
    %1371 = vmatprep.subr.mxu0 0.0
    %1372 = vmatpush1.msra.mxu0 %v187
    %1373 = vmatprep.subr.mxu0 0.0
    %1374 = vmatpush1.msra.mxu0 %v186
    %1375 = vmatprep.subr.mxu0 0.0
    %1376 = vmatpush1.msra.mxu0 %v185
    %1377 = vmatprep.subr.mxu0 0.0
    %1378 = vmatpush1.msra.mxu0 %v184
    %1379 = vmatprep.subr.mxu0 0.0
    %1380 = vmatpush1.msra.mxu0 %v183
    %1381 = vmatprep.subr.mxu0 0.0
    %1382 = vmatpush1.msra.mxu0 %v182
    %1383 = vmatprep.subr.mxu0 0.0
    %1384 = vmatpush1.msra.mxu0 %v181
    %1385 = vmatprep.subr.mxu0 0.0
    %1386 = vmatpush1.msra.mxu0 %v180
    %1387 = vmatprep.subr.mxu0 0.0
    %1388 = vmatpush1.msra.mxu0 %v179
    %1389 = vmatprep.subr.mxu0 0.0
    %1390 = vmatpush1.msra.mxu0 %v178
    %1391 = vmatprep.subr.mxu0 0.0
    %1392 = vmatpush2.msra.mxu0 0.0
    %1393 = vmatprep.subr.mxu0 0.0
    %1394 = vmatpush2.msra.mxu0 0.0
    %1395 = vmatprep.subr.mxu0 0.0
    %1396 = vmatpush2.msra.mxu0 0.0
    %1397 = vmatprep.subr.mxu0 0.0
    %1398 = vmatpush2.msra.mxu0 0.0
    %1399 = vmatprep.subr.mxu0 0.0
    %1400 = vmatpush2.msra.mxu0 0.0
    %1401 = vmatprep.subr.mxu0 0.0
    %1402 = vmatpush2.msra.mxu0 0.0
    %1403 = vmatprep.subr.mxu0 0.0
    %1404 = vmatpush2.msra.mxu0 0.0
    %1405 = vmatprep.subr.mxu0 0.0
    %1406 = vmatpush2.msra.mxu0 0.0
    %1407 = vmatprep.subr.mxu0 0.0
    %1408 = vmatpush2.msra.mxu0 0.0
    %1409 = vmatprep.subr.mxu0 0.0
    %1410 = vmatpush2.msra.mxu0 0.0
    %1411 = vmatprep.subr.mxu0 0.0
    %1412 = vmatpush2.msra.mxu0 0.0
    %1413 = vmatprep.subr.mxu0 0.0
    %1414 = vmatpush2.msra.mxu0 0.0
    %1415 = vmatprep.subr.mxu0 0.0
    %1416 = vmatpush2.msra.mxu0 0.0
    %1417 = vmatprep.subr.mxu0 0.0
    %1418 = vmatpush2.msra.mxu0 0.0
    %1419 = vmatprep.subr.mxu0 0.0
    %1420 = vmatpush2.msra.mxu0 0.0
    %1421 = vmatprep.subr.mxu0 0.0
    %1422 = vmatpush2.msra.mxu0 0.0
    %1423 = vmatprep.mubr.f32.mxu0 0.0
    %1424 = vmatmul.mubr.f32.gmra.mxu0 %v1342
    %v1425 = vpop.f32.mrf.mxu0
    %v1426 = vadd.f32 0.0, %v1425
    %v1427 = vpop.f32.mrf.mxu0
    %1428 = vdwg.mxu0
    %v1429 = vadd.f32 %v1358, %v1426
    %v1430 = vtanh.pop %v1429
    %v1431 = vtanh.pop %v1430
    %1432 = vmatprep.subr.mxu0 %v225
    %1433 = vmatpush1.msra.mxu0 %v224
    %1434 = vmatprep.subr.mxu0 %v223
    %1435 = vmatpush1.msra.mxu0 %v222
    %1436 = vmatprep.subr.mxu0 %v221
    %1437 = vmatpush1.msra.mxu0 %v220
    %1438 = vmatprep.subr.mxu0 %v219
    %1439 = vmatpush1.msra.mxu0 %v218
    %1440 = vmatprep.subr.mxu0 %v217
    %1441 = vmatpush1.msra.mxu0 %v216
    %1442 = vmatprep.subr.mxu0 %v215
    %1443 = vmatpush1.msra.mxu0 %v214
    %1444 = vmatprep.subr.mxu0 %v213
    %1445 = vmatpush1.msra.mxu0 %v212
    %1446 = vmatprep.subr.mxu0 %v211
    %1447 = vmatpush1.msra.mxu0 %v210
    %1448 = vmatprep.subr.mxu0 %v209
    %1449 = vmatpush1.msra.mxu0 %v208
    %1450 = vmatprep.subr.mxu0 %v207
    %1451 = vmatpush1.msra.mxu0 %v206
    %1452 = vmatprep.subr.mxu0 %v205
    %1453 = vmatpush1.msra.mxu0 %v204
    %1454 = vmatprep.subr.mxu0 %v203
    %1455 = vmatpush1.msra.mxu0 %v202
    %1456 = vmatprep.subr.mxu0 %v201
    %1457 = vmatpush1.msra.mxu0 %v200
    %1458 = vmatprep.subr.mxu0 %v199
    %1459 = vmatpush1.msra.mxu0 %v198
    %1460 = vmatprep.subr.mxu0 %v197
    %1461 = vmatpush1.msra.mxu0 %v196
    %1462 = vmatprep.subr.mxu0 %v195
    %1463 = vmatpush1.msra.mxu0 %v194
    %1464 = vmatprep.subr.mxu0 0.0
    %1465 = vmatpush2.msra.mxu0 0.0
    %1466 = vmatprep.subr.mxu0 0.0
    %1467 = vmatpush2.msra.mxu0 0.0
    %1468 = vmatprep.subr.mxu0 0.0
    %1469 = vmatpush2.msra.mxu0 0.0
    %1470 = vmatprep.subr.mxu0 0.0
    %1471 = vmatpush2.msra.mxu0 0.0
    %1472 = vmatprep.subr.mxu0 0.0
    %1473 = vmatpush2.msra.mxu0 0.0
    %1474 = vmatprep.subr.mxu0 0.0
    %1475 = vmatpush2.msra.mxu0 0.0
    %1476 = vmatprep.subr.mxu0 0.0
    %1477 = vmatpush2.msra.mxu0 0.0
    %1478 = vmatprep.subr.mxu0 0.0
    %1479 = vmatpush2.msra.mxu0 0.0
    %1480 = vmatprep.subr.mxu0 0.0
    %1481 = vmatpush2.msra.mxu0 0.0
    %1482 = vmatprep.subr.mxu0 0.0
    %1483 = vmatpush2.msra.mxu0 0.0
    %1484 = vmatprep.subr.mxu0 0.0
    %1485 = vmatpush2.msra.mxu0 0.0
    %1486 = vmatprep.subr.mxu0 0.0
    %1487 = vmatpush2.msra.mxu0 0.0
    %1488 = vmatprep.subr.mxu0 0.0
    %1489 = vmatpush2.msra.mxu0 0.0
    %1490 = vmatprep.subr.mxu0 0.0
    %1491 = vmatpush2.msra.mxu0 0.0
    %1492 = vmatprep.subr.mxu0 0.0
    %1493 = vmatpush2.msra.mxu0 0.0
    %1494 = vmatprep.subr.mxu0 0.0
    %1495 = vmatpush2.msra.mxu0 0.0
    %1496 = vmatprep.mubr.f32.mxu0 0.0
    %1497 = vmatmul.mubr.f32.gmra.mxu0 %v1431
    %v1498 = vpop.f32.mrf.mxu0
    %v1499 = vadd.f32 %v311, %v1498
    %v1500 = vpop.f32.mrf.mxu0
    %v1501 = vadd.f32 %v315, %v1500
    %1502 = vdwg.mxu0
    %v1503 = vsel %vm229, %v1499, -inf
    %v1504 = vsel %vm390, %v1503, -inf
    %1505 = vmax.xlane.f32.xlu0 %v1504
    %v1506 = vpop.xlane.xlu0 %1505
    %v1507 = vsub.f32 %v1503, %v1506
    %v1508 = vmul.f32 %v1507, 1.442695
    %v1509 = vpow.pop %v1508
    %v1510 = vsel %vm390, %v1509, 0.0
    %1511 = vadd.xlane.f32.xlu0 %v1510
    %v1512 = vpop.xlane.xlu0 %1511
    %v1513 = vrcp.pop %v1512
    %v1514 = vmul.f32 %v1509, %v1513
    %1515 = vst [vmem:[#allocation11 + $0x7] sm:$0x1] %v1514
    %1516 = vst [vmem:[#allocation12 + $0x7] sm:$0x1] %v1501
    // Predicated region
    $region46: #{tpu_custom_call.1} parent=1 // pred_check
      _
    $region47: #{tpu_custom_call.1} parent=1 // pred_check_branch
      %1518 = sbr.rel (0) target = $region49
    $region48: #{tpu_custom_call.1} parent=1 // pred_region
      %s1520 = ssub.s32 128, 128
      %1521 = vsyncadd [#allocation5], %s1520
      %s1523 = sshll.u32 [#allocation11], 4
      %s1524 = int_to_ptr.vmem [resolvable:$true] %s1523
      %1526 = dma.vmem_to_hbm [thread:$0]  %s1524, 128, %s7, [#allocation5]
    $region49: #{tpu_custom_call.1} parent=1 // pred_fallthru
      _
    // Predicated region
    $region50: #{tpu_custom_call.1} parent=1 // pred_check
      _
    $region51: #{tpu_custom_call.1} parent=1 // pred_check_branch
      %1528 = sbr.rel (0) target = $region53
    $region52: #{tpu_custom_call.1} parent=1 // pred_region
      %s1530 = ssub.s32 128, 128
      %1531 = vsyncadd [#allocation13], %s1530
      %s1533 = sshll.u32 [#allocation12], 4
      %s1534 = int_to_ptr.vmem [resolvable:$true] %s1533
      %1536 = dma.vmem_to_hbm [thread:$0]  %s1534, 128, %s8, [#allocation13]
    $region53: #{tpu_custom_call.1} parent=1 // pred_fallthru
      _
    // Predicated region
    $region54: #{tpu_custom_call.1} parent=1 // pred_check
      _
    $region55: #{tpu_custom_call.1} parent=1 // pred_check_branch
      %1538 = sbr.rel (0) target = $region57
    $region56: #{tpu_custom_call.1} parent=1 // pred_region
      %1539 = dma.done [#allocation5], 128
    $region57: #{tpu_custom_call.1} parent=1 // pred_fallthru
      _
    // Predicated region
    $region58: #{tpu_custom_call.1} parent=1 // pred_check
      _
    $region59: #{tpu_custom_call.1} parent=1 // pred_check_branch
      %1541 = sbr.rel (0) target = $region61
    $region60: #{tpu_custom_call.1} parent=1 // pred_region
      %1542 = dma.done [#allocation13], 128
    $region61: #{tpu_custom_call.1} parent=1 // pred_fallthru
      _
    %1543 = vsyncpa [#allocation4], 1
    %1544 = vsyncpa [#allocation7], 1
    %1545 = vsyncpa [#allocation10], 1
    %1546 = vsyncpa [#allocation5], 1
    %1547 = vsyncpa [#allocation13], 1

</llo_original>
